<compile_context>
chip_gen: v7x
topology: tpu7x:2x2x1
jax: 0.10.0
libtpu: 0.0.40
codegen_flags: <defaults>
</compile_context>

<pallas_src>
import functools

import jax
import jax.numpy as jnp
from jax.experimental import pallas as pl
from jax.experimental.pallas import tpu as pltpu


def _dense_sigmoid_kernel(x_ref, w_ref, b_ref, o_ref):
    # x_ref: (tb, F) -- natural [rows, features] layout, features on lanes
    # w_ref: (1, F)  -- weight row, broadcast across sublanes
    # b_ref: (1,)    -- scalar bias in SMEM
    # o_ref: (tb, 1)
    x = x_ref[...].astype(jnp.float32)   # v5e VPU has no bf16 ALUs; compute f32
    w = w_ref[...].astype(jnp.float32)
    # K=10, N=1: VPU multiply + lane (XLU) reduce instead of a ~0.06%-utilized
    # MXU matmul.  The kernel is HBM-bound either way; this frees the MXU slot.
    y = jnp.sum(x * w, axis=-1, keepdims=True) + b_ref[0]          # (tb, 1)
    # Exact sigmoid (EUP exp + exact divide): precision is free here.
    o_ref[...] = (1.0 / (1.0 + jnp.exp(-y))).astype(o_ref.dtype)


@functools.partial(
    jax.jit, static_argnames=("block_rows", "min_pallas_batch", "force_pallas"))
def dense_sigmoid(x, w, b, *, block_rows=32768, min_pallas_batch=16384,
                  force_pallas=False):
    """y = sigmoid(x @ w + b).  x: [B, F], w: [F, 1], b: [1] -> [B, 1]."""
    B, F = x.shape
    F2, O = w.shape
    assert F == F2 and O == 1

    # Below the crossover a fused XLA reduce+sigmoid reads x exactly once with
    # zero custom-call launch cost and is strictly faster on every generation.
    # TODO(synk): benchmark the exact crossover per chip generation.
    if B < min_pallas_batch and not force_pallas:
        y = jnp.dot(x.astype(jnp.float32), w.astype(jnp.float32),
                    precision=jax.lax.Precision.HIGHEST) + b
        return jax.nn.sigmoid(y)

    # Block rows: ~1.25 MiB of x per grid step (amortizes the ~0.35 us fixed
    # per-step overhead).  Keep >= 2 blocks when the batch allows so the
    # "parallel" grid axis shards across both TensorCores on v7x.
    tb = min(block_rows, B)
    if tb == B and B >= 1024:
        tb = (((B + 1) // 2) + 7) // 8 * 8       # ~half the batch, 8-aligned
    n_blocks = pl.cdiv(B, tb)                    # partial last block is masked

    out = pl.pallas_call(
        _dense_sigmoid_kernel,
        out_shape=jax.ShapeDtypeStruct((B, 1), jnp.float32),
        grid_spec=pltpu.PrefetchScalarGridSpec(
            num_scalar_prefetch=0,
            grid=(n_blocks,),
            in_specs=[
                # x tile in its natural layout: (tb, F).  tb is 8-aligned (or
                # equals the full batch); F equals the full last dim so it is
                # exempt from the 128-lane divisibility rule.
                pl.BlockSpec((tb, F), lambda i: (i, 0)),
                # full weight row every step (tiny, stays resident in VMEM).
                pl.BlockSpec((1, F), lambda i: (0, 0)),
                # scalar bias lives in SMEM -> no VMEM DMA stream for it.
                pl.BlockSpec(memory_space=pltpu.MemorySpace.SMEM),
            ],
            out_specs=pl.BlockSpec((tb, 1), lambda i: (i, 0)),
        ),
        compiler_params=pltpu.CompilerParams(
            # independent batch tiles: shard across both TensorCores on v7x.
            dimension_semantics=("parallel",),
        ),
    )(x, w.reshape(1, F), b.reshape(1,).astype(jnp.float32))
    return out


class PallasModel:
    """JAX/Pallas analogue of the PyTorch `Model` base class with its
    documented example layers (Linear(10, 1) -> Dropout(0.5) -> Sigmoid)."""

    IN_FEATURES = 10
    OUT_FEATURES = 1

    def __init__(self, key):
        kw, kb = jax.random.split(key)
        bound = 1.0 / jnp.sqrt(float(self.IN_FEATURES))  # torch.nn.Linear init
        self.w = jax.random.uniform(
            kw, (self.IN_FEATURES, self.OUT_FEATURES),
            dtype=jnp.float32, minval=-bound, maxval=bound)
        self.b = jax.random.uniform(
            kb, (self.OUT_FEATURES,),
            dtype=jnp.float32, minval=-bound, maxval=bound)

    def __call__(self, x, training=False, force_pallas=False):
        if training:
            # TODO(synk): training-mode dropout (mask + 1/(1-p) scaling) not
            # kernelized; refuse rather than silently return inference output.
            raise NotImplementedError("training-mode forward not implemented")
        # Dropout(p=0.5) is identity at inference.
        return dense_sigmoid(x, self.w, self.b, force_pallas=force_pallas)


if __name__ == "__main__":
    key = jax.random.PRNGKey(0)
    k_model, k_x1, k_x2 = jax.random.split(key, 3)
    model = PallasModel(k_model)

    def reference(xx):
        # Exact f32 elementwise reference (avoids TPU default-precision matmul
        # rounding so the tolerance can stay tight).
        y = jnp.sum(xx * model.w[:, 0], axis=-1, keepdims=True) + model.b
        return jax.nn.sigmoid(y)

    # --- Pallas path: 2048 rows split into two 1024-row "parallel" blocks. ---
    batch = 2048
    x = jax.random.normal(k_x1, (batch, PallasModel.IN_FEATURES),
                          dtype=jnp.float32)
    y = jax.block_until_ready(model(x, training=False, force_pallas=True))
    assert y.shape == (batch, PallasModel.OUT_FEATURES)
    assert jnp.allclose(y, reference(x), atol=1e-5, rtol=1e-5), \
        "mismatch vs reference (pallas path)"

    # --- Below-crossover path: plain fused XLA (no custom-call launch). ------
    x_small = jax.random.normal(k_x2, (64, PallasModel.IN_FEATURES),
                                dtype=jnp.float32)
    y_small = jax.block_until_ready(model(x_small, training=False))
    assert jnp.allclose(y_small, reference(x_small), atol=1e-5, rtol=1e-5), \
        "mismatch vs reference (fallback)"

    print("KERNEL_OK")
</pallas_src>

<mosaic_0001>
module attributes {stable_mosaic.version = 11 : i64} {
  func.func @_dense_sigmoid_kernel(%arg0: i32, %arg1: memref<1024x10xf32, #tpu.memory_space<vmem>>, %arg2: memref<1x10xf32, #tpu.memory_space<vmem>>, %arg3: memref<1xf32, #tpu.memory_space<smem>>, %arg4: memref<1024x1xf32, #tpu.memory_space<vmem>>) attributes {dimension_semantics = [#tpu.dimension_semantics<parallel>], iteration_bounds = array<i64: 2>, scalar_prefetch = 0 : i64, scratch_operands = 0 : i64, tpu.core_type = #tpu.core_type<tc>, window_params = [{transform_indices = @transform_0, window_bounds = array<i64: 1024, 10>}, {pipeline_mode = #tpu.pipeline_mode<synchronous>, transform_indices = @transform_1, window_bounds = array<i64: 1, 10>}, {transform_indices = @transform_2, window_bounds = array<i64: 1>}, {transform_indices = @transform_3, window_bounds = array<i64: 1024, 1>}]} {
    %c0 = arith.constant 0 : index
    %c0_0 = arith.constant 0 : index
    %0 = vector.load %arg1[%c0, %c0_0] : memref<1024x10xf32, #tpu.memory_space<vmem>>, vector<1024x10xf32>
    %c0_1 = arith.constant 0 : index
    %c0_2 = arith.constant 0 : index
    %1 = vector.load %arg2[%c0_1, %c0_2] : memref<1x10xf32, #tpu.memory_space<vmem>>, vector<1x10xf32>
    %2 = vector.broadcast %1 : vector<1x10xf32> to vector<1024x10xf32>
    %3 = arith.mulf %0, %2 : vector<1024x10xf32>
    %cst = arith.constant dense<0.000000e+00> : vector<1024xf32>
    %4 = vector.multi_reduction <add>, %3, %cst [1] : vector<1024x10xf32> to vector<1024xf32>
    %5 = vector.shape_cast %4 : vector<1024xf32> to vector<1024x1xf32>
    %c0_3 = arith.constant 0 : index
    %6 = memref.load %arg3[%c0_3] : memref<1xf32, #tpu.memory_space<smem>>
    %7 = vector.broadcast %6 : f32 to vector<1024x1xf32>
    %8 = arith.addf %5, %7 : vector<1024x1xf32>
    %cst_4 = arith.constant 0.000000e+00 : f32
    %9 = vector.broadcast %cst_4 : f32 to vector<1024x1xf32>
    %10 = arith.subf %9, %8 : vector<1024x1xf32>
    %11 = math.exp %10 : vector<1024x1xf32>
    %cst_5 = arith.constant 1.000000e+00 : f32
    %12 = vector.broadcast %cst_5 : f32 to vector<1024x1xf32>
    %13 = arith.addf %12, %11 : vector<1024x1xf32>
    %cst_6 = arith.constant 1.000000e+00 : f32
    %14 = vector.broadcast %cst_6 : f32 to vector<1024x1xf32>
    %15 = arith.divf %14, %13 : vector<1024x1xf32>
    %c0_7 = arith.constant 0 : index
    %c0_8 = arith.constant 0 : index
    %16 = vector.load %arg4[%c0_7, %c0_8] : memref<1024x1xf32, #tpu.memory_space<vmem>>, vector<1024x1xf32>
    tpu.vector_store %arg4[%c0_7, %c0_8], %15 {strides = array<i32>} : memref<1024x1xf32, #tpu.memory_space<vmem>>, vector<1024x1xf32>,
    return
  }
  func.func @transform_0(%arg0: i32) -> (i32, i32) {
    %c0_i32 = arith.constant 0 : i32
    %c0_i32_0 = arith.constant 0 : i32
    return %arg0, %c0_i32 : i32, i32
  }
  func.func @transform_1(%arg0: i32) -> (i32, i32) {
    %c0_i32 = arith.constant 0 : i32
    %c0_i32_0 = arith.constant 0 : i32
    %c0_i32_1 = arith.constant 0 : i32
    return %c0_i32, %c0_i32_0 : i32, i32
  }
  func.func @transform_2(%arg0: i32) -> i32 {
    %c0_i32 = arith.constant 0 : i32
    %c0_i32_0 = arith.constant 0 : i32
    return %c0_i32 : i32
  }
  func.func @transform_3(%arg0: i32) -> (i32, i32) {
    %c0_i32 = arith.constant 0 : i32
    %c0_i32_0 = arith.constant 0 : i32
    return %arg0, %c0_i32 : i32, i32
  }
}

</mosaic_0001>

<llo_original>
// kernel: dense_sigmoid.1
$region0: #{dense_sigmoid.1}
  #allocation0 [shape = 'u32[]', space=smem, size = 0x4, offset = 0x4, fixed_abs, tag = 'smem constant byte address 0x4 - core index']
  #allocation1 [shape = 'u32[144,128]{1,0:T(1,128)}', space=vmem, size = 0x12000, scoped, tag = 'internal scratch']
  #allocation2 [shape = 'f32[1]{0:T(128)S(6)}', space=smem, size = 0x200, scoped, tag = 'scoped memory for dense_sigmoid.1']
  %s0 = inlined_call_operand.vmem [shape: f32[2048,10], index: 0, kind: input, shape index: {}]
  %s1 = inlined_call_operand.vmem [shape: f32[1,10], index: 1, kind: input, shape index: {}]
  %s2 = inlined_call_operand.<no memory space> [shape: f32[1], index: 2, kind: input, shape index: {}]
  %s3 = inlined_call_operand.vmem [shape: f32[2048,1], index: 3, kind: output, shape index: {}]
  %s4 = sld [smem:[#allocation0]]
  $region45: #{dense_sigmoid.1} parent=0
    _
  %s6 = ssub.s32 1, %s4
  %s7 = scalar_select 0, %s6, %s4
  %8 = sst [smem:[#allocation2]] %s2
  loop: start=0, step=1, limit=4
  $region2: #{dense_sigmoid.1} parent=0 // loop_pre_header
    _
  $region3: #{dense_sigmoid.1} parent=0 // loop_header
    %s10 = sphi 0, %s14
    %p11 = scmp.ge.s32.totalorder %s10, 4
    %s20 = sphi 0, %s22
    %s23 = sphi 0, %s20
    %s24 = sphi 0, %s23
    %s40 = sphi 0, %s24
    %s44 = sphi 0, %s44
    %s46 = sphi 0, %s44
    %s47 = sphi 0, %s46
    %s61 = sphi 0, %s47
    %s65 = sphi 0, %s65
    %s67 = sphi 0, %s65
    %s68 = sphi 0, %s67
    %s82 = sphi 0, %s68
    %s88 = sphi 0, %s90
    %s91 = sphi 0, %s88
    %s92 = sphi 0, %s91
    %s108 = sphi 0, %s92
  $region4: #{dense_sigmoid.1} parent=0 // loop_header_branch
    %13 = sbr.rel (%p11) target = $region8
  $region5: #{dense_sigmoid.1} parent=0 // loop_body
    %s15 = ssub.s32 %s10, 1
    %s16 = ssub.s32 %s10, 2
    %s17 = sadd.s32 %s10, 1
    %s18 = ssub.s32 %s10, %s17
    %p19 = scmp.eq.s32.totalorder %s18, 0
    %s21 = sadd.s32 %s20, 1
    %s22 = scalar_select %p19, %s20, %s21
    %p25 = pneg %p19
    %p26 = scmp.eq.s32.totalorder %s10, 1
    %p27 = por %p25, %p26
    %p28 = scmp.ne.s32.totalorder %s20, %s23
    %p29 = scmp.eq.s32.totalorder %s10, 0
    %p30 = por %p28, %p29
    %p31 = scmp.ne.s32.totalorder %s20, %s23
    %p32 = scmp.eq.s32.totalorder %s15, 1
    %p33 = por %p31, %p32
    %p34 = scmp.ne.s32.totalorder %s23, %s24
    %p35 = scmp.eq.s32.totalorder %s15, 0
    %p36 = por %p34, %p35
    %p37 = scmp.ne.s32.totalorder %s23, %s24
    %p38 = scmp.eq.s32.totalorder %s16, 1
    %p39 = por %p37, %p38
    %p41 = scmp.ne.s32.totalorder %s24, %s40
    %p42 = scmp.eq.s32.totalorder %s16, 0
    %p43 = por %p41, %p42
    %s45 = sadd.s32 %s44, 1
    %p48 = scmp.eq.s32.totalorder %s10, 1
    %p49 = scmp.ne.s32.totalorder %s44, %s46
    %p50 = scmp.eq.s32.totalorder %s10, 0
    %p51 = por %p49, %p50
    %p52 = scmp.ne.s32.totalorder %s44, %s46
    %p53 = scmp.eq.s32.totalorder %s15, 1
    %p54 = por %p52, %p53
    %p55 = scmp.ne.s32.totalorder %s46, %s47
    %p56 = scmp.eq.s32.totalorder %s15, 0
    %p57 = por %p55, %p56
    %p58 = scmp.ne.s32.totalorder %s46, %s47
    %p59 = scmp.eq.s32.totalorder %s16, 1
    %p60 = por %p58, %p59
    %p62 = scmp.ne.s32.totalorder %s47, %s61
    %p63 = scmp.eq.s32.totalorder %s16, 0
    %p64 = por %p62, %p63
    %s66 = sadd.s32 %s65, 1
    %p69 = scmp.eq.s32.totalorder %s10, 1
    %p70 = scmp.ne.s32.totalorder %s65, %s67
    %p71 = scmp.eq.s32.totalorder %s10, 0
    %p72 = por %p70, %p71
    %p73 = scmp.ne.s32.totalorder %s65, %s67
    %p74 = scmp.eq.s32.totalorder %s15, 1
    %p75 = por %p73, %p74
    %p76 = scmp.ne.s32.totalorder %s67, %s68
    %p77 = scmp.eq.s32.totalorder %s15, 0
    %p78 = por %p76, %p77
    %p79 = scmp.ne.s32.totalorder %s67, %s68
    %p80 = scmp.eq.s32.totalorder %s16, 1
    %p81 = por %p79, %p80
    %p83 = scmp.ne.s32.totalorder %s68, %s82
    %p84 = scmp.eq.s32.totalorder %s16, 0
    %p85 = por %p83, %p84
    %s86 = ssub.s32 %s10, %s17
    %p87 = scmp.eq.s32.totalorder %s86, 0
    %s89 = sadd.s32 %s88, 1
    %s90 = scalar_select %p87, %s88, %s89
    %p93 = pneg %p87
    %p94 = scmp.eq.s32.totalorder %s10, 1
    %p95 = por %p93, %p94
    %p96 = scmp.ne.s32.totalorder %s88, %s91
    %p97 = scmp.eq.s32.totalorder %s10, 0
    %p98 = por %p96, %p97
    %p99 = scmp.ne.s32.totalorder %s88, %s91
    %p100 = scmp.eq.s32.totalorder %s15, 1
    %p101 = por %p99, %p100
    %p102 = scmp.ne.s32.totalorder %s91, %s92
    %p103 = scmp.eq.s32.totalorder %s15, 0
    %p104 = por %p102, %p103
    %p105 = scmp.ne.s32.totalorder %s91, %s92
    %p106 = scmp.eq.s32.totalorder %s16, 1
    %p107 = por %p105, %p106
    %p109 = scmp.ne.s32.totalorder %s92, %s108
    %p110 = scmp.eq.s32.totalorder %s16, 0
    %p111 = por %p109, %p110
    %p112 = scmp.le.s32.totalorder 1, %s10
    %p113 = scmp.lt.s32.totalorder %s10, 3
    %p114 = pnand %p112, %p113
    %p115 = pneg %p114
    // Predicated region
    $region9: #{dense_sigmoid.1} parent=5 // pred_check
      _
    $region10: #{dense_sigmoid.1} parent=5 // pred_check_branch
      %117 = sbr.rel (%p114) target = $region12
    $region11: #{dense_sigmoid.1} parent=5 // pred_region
      %s118 = ssub.s32 %s10, 1
      // Predicated region
      $region13: #{dense_sigmoid.1} parent=11 // pred_check
        %p119 = pneg %p57
      $region14: #{dense_sigmoid.1} parent=11 // pred_check_branch
        %121 = sbr.rel (%p119) target = $region16
      $region15: #{dense_sigmoid.1} parent=11 // pred_region
        _
      $region16: #{dense_sigmoid.1} parent=11 // pred_fallthru
        _
      // Predicated region
      $region17: #{dense_sigmoid.1} parent=11 // pred_check
        %p122 = pneg %p78
      $region18: #{dense_sigmoid.1} parent=11 // pred_check_branch
        %124 = sbr.rel (%p122) target = $region20
      $region19: #{dense_sigmoid.1} parent=11 // pred_region
        _
      $region20: #{dense_sigmoid.1} parent=11 // pred_fallthru
        _
    $region12: #{dense_sigmoid.1} parent=5 // pred_fallthru
      _
    %p125 = scmp.lt.s32.totalorder %s10, 2
    // Predicated region
    $region21: #{dense_sigmoid.1} parent=5 // pred_check
      %p126 = pneg %p125
    $region22: #{dense_sigmoid.1} parent=5 // pred_check_branch
      %128 = sbr.rel (%p126) target = $region24
    $region23: #{dense_sigmoid.1} parent=5 // pred_region
      // Predicated region
      $region25: #{dense_sigmoid.1} parent=23 // pred_check
        %p129 = pneg %p30
      $region26: #{dense_sigmoid.1} parent=23 // pred_check_branch
        %131 = sbr.rel (%p129) target = $region28
      $region27: #{dense_sigmoid.1} parent=23 // pred_region
        %s132 = smul.u32 128, %s10
        %p133 = scmp.lt.s32.totalorder %s132, 255
        %s134 = scalar_select %p133, %s132, 255
        %s135 = smul.addr %s134, 8
        %s136 = scalar_lea.vmem %s0, %s135
        %s137 = smul.u32 128, %s10
      $region28: #{dense_sigmoid.1} parent=23 // pred_fallthru
        _
    $region24: #{dense_sigmoid.1} parent=5 // pred_fallthru
      _
    %p138 = scmp.le.s32.totalorder 1, %s10
    %p139 = scmp.lt.s32.totalorder %s10, 3
    %p140 = pnand %p138, %p139
    %p141 = pneg %p140
    // Predicated region
    $region29: #{dense_sigmoid.1} parent=5 // pred_check
      _
    $region30: #{dense_sigmoid.1} parent=5 // pred_check_branch
      %143 = sbr.rel (%p140) target = $region32
    $region31: #{dense_sigmoid.1} parent=5 // pred_region
      %s144 = ssub.s32 %s10, 1
      %s145 = smul.u32 128, %s15
      %p146 = scmp.lt.s32.totalorder %s145, 255
      %s147 = scalar_select %p146, %s145, 255
      %s148 = smul.addr %s147, 8
      %s149 = scalar_lea.vmem %s0, %s148
      %p150 = pneg %p36
      %p151 = pneg %p33
      %p152 = pneg %p57
      %p153 = pneg %p54
      %p154 = pneg %p78
      %p155 = pneg %p75
      %p156 = pneg %p104
      %p157 = pneg %p101
      %s158 = smul.u32 128, %s15
      %p159 = scmp.lt.s32.totalorder %s158, 255
      %s160 = scalar_select %p159, %s158, 255
      %s161 = smul.addr %s160, 8
      %s162 = scalar_lea.vmem %s3, %s161
      %s163 = smul.u32 128, %s15
      %p164 = scmp.lt.s32.totalorder %s163, 255
      %s165 = scalar_select %p164, %s163, 255
      %s166 = smul.addr %s165, 8
      %s167 = scalar_lea.vmem %s0, %s166
      %s168 = smul.u32 128, %s15
      %s169 = smul.u32 128, %s15
      %p170 = scmp.lt.s32.totalorder %s169, 255
      %s171 = scalar_select %p170, %s169, 255
      %s172 = smul.addr %s171, 8
      %s173 = scalar_lea.vmem %s3, %s172
      %s174 = smul.u32 128, %s15
      %v175 = vld [vmem:[%s167] sm:$0xff]
      %v176 = vld [vmem:[%s167 + $0x8] sm:$0xff]
      %v177 = vld [vmem:[%s167 + $0x10] sm:$0xff]
      %v178 = vld [vmem:[%s167 + $0x18] sm:$0xff]
      %v179 = vld [vmem:[%s167 + $0x20] sm:$0xff]
      %v180 = vld [vmem:[%s167 + $0x28] sm:$0xff]
      %v181 = vld [vmem:[%s167 + $0x30] sm:$0xff]
      %v182 = vld [vmem:[%s167 + $0x38] sm:$0xff]
      %v183 = vld [vmem:[%s167 + $0x40] sm:$0xff]
      %v184 = vld [vmem:[%s167 + $0x48] sm:$0xff]
      %v185 = vld [vmem:[%s167 + $0x50] sm:$0xff]
      %v186 = vld [vmem:[%s167 + $0x58] sm:$0xff]
      %v187 = vld [vmem:[%s167 + $0x60] sm:$0xff]
      %v188 = vld [vmem:[%s167 + $0x68] sm:$0xff]
      %v189 = vld [vmem:[%s167 + $0x70] sm:$0xff]
      %v190 = vld [vmem:[%s167 + $0x78] sm:$0xff]
      %v191 = vld [vmem:[%s167 + $0x80] sm:$0xff]
      %v192 = vld [vmem:[%s167 + $0x88] sm:$0xff]
      %v193 = vld [vmem:[%s167 + $0x90] sm:$0xff]
      %v194 = vld [vmem:[%s167 + $0x98] sm:$0xff]
      %v195 = vld [vmem:[%s167 + $0xa0] sm:$0xff]
      %v196 = vld [vmem:[%s167 + $0xa8] sm:$0xff]
      %v197 = vld [vmem:[%s167 + $0xb0] sm:$0xff]
      %v198 = vld [vmem:[%s167 + $0xb8] sm:$0xff]
      %v199 = vld [vmem:[%s167 + $0xc0] sm:$0xff]
      %v200 = vld [vmem:[%s167 + $0xc8] sm:$0xff]
      %v201 = vld [vmem:[%s167 + $0xd0] sm:$0xff]
      %v202 = vld [vmem:[%s167 + $0xd8] sm:$0xff]
      %v203 = vld [vmem:[%s167 + $0xe0] sm:$0xff]
      %v204 = vld [vmem:[%s167 + $0xe8] sm:$0xff]
      %v205 = vld [vmem:[%s167 + $0xf0] sm:$0xff]
      %v206 = vld [vmem:[%s167 + $0xf8] sm:$0xff]
      %v207 = vld [vmem:[%s167 + $0x100] sm:$0xff]
      %v208 = vld [vmem:[%s167 + $0x108] sm:$0xff]
      %v209 = vld [vmem:[%s167 + $0x110] sm:$0xff]
      %v210 = vld [vmem:[%s167 + $0x118] sm:$0xff]
      %v211 = vld [vmem:[%s167 + $0x120] sm:$0xff]
      %v212 = vld [vmem:[%s167 + $0x128] sm:$0xff]
      %v213 = vld [vmem:[%s167 + $0x130] sm:$0xff]
      %v214 = vld [vmem:[%s167 + $0x138] sm:$0xff]
      %v215 = vld [vmem:[%s167 + $0x140] sm:$0xff]
      %v216 = vld [vmem:[%s167 + $0x148] sm:$0xff]
      %v217 = vld [vmem:[%s167 + $0x150] sm:$0xff]
      %v218 = vld [vmem:[%s167 + $0x158] sm:$0xff]
      %v219 = vld [vmem:[%s167 + $0x160] sm:$0xff]
      %v220 = vld [vmem:[%s167 + $0x168] sm:$0xff]
      %v221 = vld [vmem:[%s167 + $0x170] sm:$0xff]
      %v222 = vld [vmem:[%s167 + $0x178] sm:$0xff]
      %v223 = vld [vmem:[%s167 + $0x180] sm:$0xff]
      %v224 = vld [vmem:[%s167 + $0x188] sm:$0xff]
      %v225 = vld [vmem:[%s167 + $0x190] sm:$0xff]
      %v226 = vld [vmem:[%s167 + $0x198] sm:$0xff]
      %v227 = vld [vmem:[%s167 + $0x1a0] sm:$0xff]
      %v228 = vld [vmem:[%s167 + $0x1a8] sm:$0xff]
      %v229 = vld [vmem:[%s167 + $0x1b0] sm:$0xff]
      %v230 = vld [vmem:[%s167 + $0x1b8] sm:$0xff]
      %v231 = vld [vmem:[%s167 + $0x1c0] sm:$0xff]
      %v232 = vld [vmem:[%s167 + $0x1c8] sm:$0xff]
      %v233 = vld [vmem:[%s167 + $0x1d0] sm:$0xff]
      %v234 = vld [vmem:[%s167 + $0x1d8] sm:$0xff]
      %v235 = vld [vmem:[%s167 + $0x1e0] sm:$0xff]
      %v236 = vld [vmem:[%s167 + $0x1e8] sm:$0xff]
      %v237 = vld [vmem:[%s167 + $0x1f0] sm:$0xff]
      %v238 = vld [vmem:[%s167 + $0x1f8] sm:$0xff]
      %v239 = vld [vmem:[%s167 + $0x200] sm:$0xff]
      %v240 = vld [vmem:[%s167 + $0x208] sm:$0xff]
      %v241 = vld [vmem:[%s167 + $0x210] sm:$0xff]
      %v242 = vld [vmem:[%s167 + $0x218] sm:$0xff]
      %v243 = vld [vmem:[%s167 + $0x220] sm:$0xff]
      %v244 = vld [vmem:[%s167 + $0x228] sm:$0xff]
      %v245 = vld [vmem:[%s167 + $0x230] sm:$0xff]
      %v246 = vld [vmem:[%s167 + $0x238] sm:$0xff]
      %v247 = vld [vmem:[%s167 + $0x240] sm:$0xff]
      %v248 = vld [vmem:[%s167 + $0x248] sm:$0xff]
      %v249 = vld [vmem:[%s167 + $0x250] sm:$0xff]
      %v250 = vld [vmem:[%s167 + $0x258] sm:$0xff]
      %v251 = vld [vmem:[%s167 + $0x260] sm:$0xff]
      %v252 = vld [vmem:[%s167 + $0x268] sm:$0xff]
      %v253 = vld [vmem:[%s167 + $0x270] sm:$0xff]
      %v254 = vld [vmem:[%s167 + $0x278] sm:$0xff]
      %v255 = vld [vmem:[%s167 + $0x280] sm:$0xff]
      %v256 = vld [vmem:[%s167 + $0x288] sm:$0xff]
      %v257 = vld [vmem:[%s167 + $0x290] sm:$0xff]
      %v258 = vld [vmem:[%s167 + $0x298] sm:$0xff]
      %v259 = vld [vmem:[%s167 + $0x2a0] sm:$0xff]
      %v260 = vld [vmem:[%s167 + $0x2a8] sm:$0xff]
      %v261 = vld [vmem:[%s167 + $0x2b0] sm:$0xff]
      %v262 = vld [vmem:[%s167 + $0x2b8] sm:$0xff]
      %v263 = vld [vmem:[%s167 + $0x2c0] sm:$0xff]
      %v264 = vld [vmem:[%s167 + $0x2c8] sm:$0xff]
      %v265 = vld [vmem:[%s167 + $0x2d0] sm:$0xff]
      %v266 = vld [vmem:[%s167 + $0x2d8] sm:$0xff]
      %v267 = vld [vmem:[%s167 + $0x2e0] sm:$0xff]
      %v268 = vld [vmem:[%s167 + $0x2e8] sm:$0xff]
      %v269 = vld [vmem:[%s167 + $0x2f0] sm:$0xff]
      %v270 = vld [vmem:[%s167 + $0x2f8] sm:$0xff]
      %v271 = vld [vmem:[%s167 + $0x300] sm:$0xff]
      %v272 = vld [vmem:[%s167 + $0x308] sm:$0xff]
      %v273 = vld [vmem:[%s167 + $0x310] sm:$0xff]
      %v274 = vld [vmem:[%s167 + $0x318] sm:$0xff]
      %v275 = vld [vmem:[%s167 + $0x320] sm:$0xff]
      %v276 = vld [vmem:[%s167 + $0x328] sm:$0xff]
      %v277 = vld [vmem:[%s167 + $0x330] sm:$0xff]
      %v278 = vld [vmem:[%s167 + $0x338] sm:$0xff]
      %v279 = vld [vmem:[%s167 + $0x340] sm:$0xff]
      %v280 = vld [vmem:[%s167 + $0x348] sm:$0xff]
      %v281 = vld [vmem:[%s167 + $0x350] sm:$0xff]
      %v282 = vld [vmem:[%s167 + $0x358] sm:$0xff]
      %v283 = vld [vmem:[%s167 + $0x360] sm:$0xff]
      %v284 = vld [vmem:[%s167 + $0x368] sm:$0xff]
      %v285 = vld [vmem:[%s167 + $0x370] sm:$0xff]
      %v286 = vld [vmem:[%s167 + $0x378] sm:$0xff]
      %v287 = vld [vmem:[%s167 + $0x380] sm:$0xff]
      %v288 = vld [vmem:[%s167 + $0x388] sm:$0xff]
      %v289 = vld [vmem:[%s167 + $0x390] sm:$0xff]
      %v290 = vld [vmem:[%s167 + $0x398] sm:$0xff]
      %v291 = vld [vmem:[%s167 + $0x3a0] sm:$0xff]
      %v292 = vld [vmem:[%s167 + $0x3a8] sm:$0xff]
      %v293 = vld [vmem:[%s167 + $0x3b0] sm:$0xff]
      %v294 = vld [vmem:[%s167 + $0x3b8] sm:$0xff]
      %v295 = vld [vmem:[%s167 + $0x3c0] sm:$0xff]
      %v296 = vld [vmem:[%s167 + $0x3c8] sm:$0xff]
      %v297 = vld [vmem:[%s167 + $0x3d0] sm:$0xff]
      %v298 = vld [vmem:[%s167 + $0x3d8] sm:$0xff]
      %v299 = vld [vmem:[%s167 + $0x3e0] sm:$0xff]
      %v300 = vld [vmem:[%s167 + $0x3e8] sm:$0xff]
      %v301 = vld [vmem:[%s167 + $0x3f0] sm:$0xff]
      %v302 = vld [vmem:[%s167 + $0x3f8] sm:$0xff]
      %v303 = vld [vmem:[%s1] sm:$0x1]
      %v305 = vlaneseq
      %v306 = vshrl.u32 %v305, 7
      %v307 = vsub.s32 0, %v306
      %v308 = vrot.slane %v303, %v307
      %v310 = vmul.f32 %v175, %v308
      %v311 = vmul.f32 %v176, %v308
      %v312 = vmul.f32 %v177, %v308
      %v313 = vmul.f32 %v178, %v308
      %v314 = vmul.f32 %v179, %v308
      %v315 = vmul.f32 %v180, %v308
      %v316 = vmul.f32 %v181, %v308
      %v317 = vmul.f32 %v182, %v308
      %v318 = vmul.f32 %v183, %v308
      %v319 = vmul.f32 %v184, %v308
      %v320 = vmul.f32 %v185, %v308
      %v321 = vmul.f32 %v186, %v308
      %v322 = vmul.f32 %v187, %v308
      %v323 = vmul.f32 %v188, %v308
      %v324 = vmul.f32 %v189, %v308
      %v325 = vmul.f32 %v190, %v308
      %v326 = vmul.f32 %v191, %v308
      %v327 = vmul.f32 %v192, %v308
      %v328 = vmul.f32 %v193, %v308
      %v329 = vmul.f32 %v194, %v308
      %v330 = vmul.f32 %v195, %v308
      %v331 = vmul.f32 %v196, %v308
      %v332 = vmul.f32 %v197, %v308
      %v333 = vmul.f32 %v198, %v308
      %v334 = vmul.f32 %v199, %v308
      %v335 = vmul.f32 %v200, %v308
      %v336 = vmul.f32 %v201, %v308
      %v337 = vmul.f32 %v202, %v308
      %v338 = vmul.f32 %v203, %v308
      %v339 = vmul.f32 %v204, %v308
      %v340 = vmul.f32 %v205, %v308
      %v341 = vmul.f32 %v206, %v308
      %v342 = vmul.f32 %v207, %v308
      %v343 = vmul.f32 %v208, %v308
      %v344 = vmul.f32 %v209, %v308
      %v345 = vmul.f32 %v210, %v308
      %v346 = vmul.f32 %v211, %v308
      %v347 = vmul.f32 %v212, %v308
      %v348 = vmul.f32 %v213, %v308
      %v349 = vmul.f32 %v214, %v308
      %v350 = vmul.f32 %v215, %v308
      %v351 = vmul.f32 %v216, %v308
      %v352 = vmul.f32 %v217, %v308
      %v353 = vmul.f32 %v218, %v308
      %v354 = vmul.f32 %v219, %v308
      %v355 = vmul.f32 %v220, %v308
      %v356 = vmul.f32 %v221, %v308
      %v357 = vmul.f32 %v222, %v308
      %v358 = vmul.f32 %v223, %v308
      %v359 = vmul.f32 %v224, %v308
      %v360 = vmul.f32 %v225, %v308
      %v361 = vmul.f32 %v226, %v308
      %v362 = vmul.f32 %v227, %v308
      %v363 = vmul.f32 %v228, %v308
      %v364 = vmul.f32 %v229, %v308
      %v365 = vmul.f32 %v230, %v308
      %v366 = vmul.f32 %v231, %v308
      %v367 = vmul.f32 %v232, %v308
      %v368 = vmul.f32 %v233, %v308
      %v369 = vmul.f32 %v234, %v308
      %v370 = vmul.f32 %v235, %v308
      %v371 = vmul.f32 %v236, %v308
      %v372 = vmul.f32 %v237, %v308
      %v373 = vmul.f32 %v238, %v308
      %v374 = vmul.f32 %v239, %v308
      %v375 = vmul.f32 %v240, %v308
      %v376 = vmul.f32 %v241, %v308
      %v377 = vmul.f32 %v242, %v308
      %v378 = vmul.f32 %v243, %v308
      %v379 = vmul.f32 %v244, %v308
      %v380 = vmul.f32 %v245, %v308
      %v381 = vmul.f32 %v246, %v308
      %v382 = vmul.f32 %v247, %v308
      %v383 = vmul.f32 %v248, %v308
      %v384 = vmul.f32 %v249, %v308
      %v385 = vmul.f32 %v250, %v308
      %v386 = vmul.f32 %v251, %v308
      %v387 = vmul.f32 %v252, %v308
      %v388 = vmul.f32 %v253, %v308
      %v389 = vmul.f32 %v254, %v308
      %v390 = vmul.f32 %v255, %v308
      %v391 = vmul.f32 %v256, %v308
      %v392 = vmul.f32 %v257, %v308
      %v393 = vmul.f32 %v258, %v308
      %v394 = vmul.f32 %v259, %v308
      %v395 = vmul.f32 %v260, %v308
      %v396 = vmul.f32 %v261, %v308
      %v397 = vmul.f32 %v262, %v308
      %v398 = vmul.f32 %v263, %v308
      %v399 = vmul.f32 %v264, %v308
      %v400 = vmul.f32 %v265, %v308
      %v401 = vmul.f32 %v266, %v308
      %v402 = vmul.f32 %v267, %v308
      %v403 = vmul.f32 %v268, %v308
      %v404 = vmul.f32 %v269, %v308
      %v405 = vmul.f32 %v270, %v308
      %v406 = vmul.f32 %v271, %v308
      %v407 = vmul.f32 %v272, %v308
      %v408 = vmul.f32 %v273, %v308
      %v409 = vmul.f32 %v274, %v308
      %v410 = vmul.f32 %v275, %v308
      %v411 = vmul.f32 %v276, %v308
      %v412 = vmul.f32 %v277, %v308
      %v413 = vmul.f32 %v278, %v308
      %v414 = vmul.f32 %v279, %v308
      %v415 = vmul.f32 %v280, %v308
      %v416 = vmul.f32 %v281, %v308
      %v417 = vmul.f32 %v282, %v308
      %v418 = vmul.f32 %v283, %v308
      %v419 = vmul.f32 %v284, %v308
      %v420 = vmul.f32 %v285, %v308
      %v421 = vmul.f32 %v286, %v308
      %v422 = vmul.f32 %v287, %v308
      %v423 = vmul.f32 %v288, %v308
      %v424 = vmul.f32 %v289, %v308
      %v425 = vmul.f32 %v290, %v308
      %v426 = vmul.f32 %v291, %v308
      %v427 = vmul.f32 %v292, %v308
      %v428 = vmul.f32 %v293, %v308
      %v429 = vmul.f32 %v294, %v308
      %v430 = vmul.f32 %v295, %v308
      %v431 = vmul.f32 %v296, %v308
      %v432 = vmul.f32 %v297, %v308
      %v433 = vmul.f32 %v298, %v308
      %v434 = vmul.f32 %v299, %v308
      %v435 = vmul.f32 %v300, %v308
      %v436 = vmul.f32 %v301, %v308
      %v437 = vmul.f32 %v302, %v308
      %vm438 = vcmask 80896
      %v439 = vsel %vm438, %v310, 0.0
      %440 = vadd.xlane.f32.xlu0 %v439
      %v441 = vpop.xlane.xlu0 %440
      %v442 = vsel %vm438, %v311, 0.0
      %443 = vadd.xlane.f32.xlu0 %v442
      %v444 = vpop.xlane.xlu0 %443
      %v445 = vsel %vm438, %v312, 0.0
      %446 = vadd.xlane.f32.xlu0 %v445
      %v447 = vpop.xlane.xlu0 %446
      %v448 = vsel %vm438, %v313, 0.0
      %449 = vadd.xlane.f32.xlu0 %v448
      %v450 = vpop.xlane.xlu0 %449
      %v451 = vsel %vm438, %v314, 0.0
      %452 = vadd.xlane.f32.xlu0 %v451
      %v453 = vpop.xlane.xlu0 %452
      %v454 = vsel %vm438, %v315, 0.0
      %455 = vadd.xlane.f32.xlu0 %v454
      %v456 = vpop.xlane.xlu0 %455
      %v457 = vsel %vm438, %v316, 0.0
      %458 = vadd.xlane.f32.xlu0 %v457
      %v459 = vpop.xlane.xlu0 %458
      %v460 = vsel %vm438, %v317, 0.0
      %461 = vadd.xlane.f32.xlu0 %v460
      %v462 = vpop.xlane.xlu0 %461
      %v463 = vsel %vm438, %v318, 0.0
      %464 = vadd.xlane.f32.xlu0 %v463
      %v465 = vpop.xlane.xlu0 %464
      %v466 = vsel %vm438, %v319, 0.0
      %467 = vadd.xlane.f32.xlu0 %v466
      %v468 = vpop.xlane.xlu0 %467
      %v469 = vsel %vm438, %v320, 0.0
      %470 = vadd.xlane.f32.xlu0 %v469
      %v471 = vpop.xlane.xlu0 %470
      %v472 = vsel %vm438, %v321, 0.0
      %473 = vadd.xlane.f32.xlu0 %v472
      %v474 = vpop.xlane.xlu0 %473
      %v475 = vsel %vm438, %v322, 0.0
      %476 = vadd.xlane.f32.xlu0 %v475
      %v477 = vpop.xlane.xlu0 %476
      %v478 = vsel %vm438, %v323, 0.0
      %479 = vadd.xlane.f32.xlu0 %v478
      %v480 = vpop.xlane.xlu0 %479
      %v481 = vsel %vm438, %v324, 0.0
      %482 = vadd.xlane.f32.xlu0 %v481
      %v483 = vpop.xlane.xlu0 %482
      %v484 = vsel %vm438, %v325, 0.0
      %485 = vadd.xlane.f32.xlu0 %v484
      %v486 = vpop.xlane.xlu0 %485
      %v487 = vsel %vm438, %v326, 0.0
      %488 = vadd.xlane.f32.xlu0 %v487
      %v489 = vpop.xlane.xlu0 %488
      %v490 = vsel %vm438, %v327, 0.0
      %491 = vadd.xlane.f32.xlu0 %v490
      %v492 = vpop.xlane.xlu0 %491
      %v493 = vsel %vm438, %v328, 0.0
      %494 = vadd.xlane.f32.xlu0 %v493
      %v495 = vpop.xlane.xlu0 %494
      %v496 = vsel %vm438, %v329, 0.0
      %497 = vadd.xlane.f32.xlu0 %v496
      %v498 = vpop.xlane.xlu0 %497
      %v499 = vsel %vm438, %v330, 0.0
      %500 = vadd.xlane.f32.xlu0 %v499
      %v501 = vpop.xlane.xlu0 %500
      %v502 = vsel %vm438, %v331, 0.0
      %503 = vadd.xlane.f32.xlu0 %v502
      %v504 = vpop.xlane.xlu0 %503
      %v505 = vsel %vm438, %v332, 0.0
      %506 = vadd.xlane.f32.xlu0 %v505
      %v507 = vpop.xlane.xlu0 %506
      %v508 = vsel %vm438, %v333, 0.0
      %509 = vadd.xlane.f32.xlu0 %v508
      %v510 = vpop.xlane.xlu0 %509
      %v511 = vsel %vm438, %v334, 0.0
      %512 = vadd.xlane.f32.xlu0 %v511
      %v513 = vpop.xlane.xlu0 %512
      %v514 = vsel %vm438, %v335, 0.0
      %515 = vadd.xlane.f32.xlu0 %v514
      %v516 = vpop.xlane.xlu0 %515
      %v517 = vsel %vm438, %v336, 0.0
      %518 = vadd.xlane.f32.xlu0 %v517
      %v519 = vpop.xlane.xlu0 %518
      %v520 = vsel %vm438, %v337, 0.0
      %521 = vadd.xlane.f32.xlu0 %v520
      %v522 = vpop.xlane.xlu0 %521
      %v523 = vsel %vm438, %v338, 0.0
      %524 = vadd.xlane.f32.xlu0 %v523
      %v525 = vpop.xlane.xlu0 %524
      %v526 = vsel %vm438, %v339, 0.0
      %527 = vadd.xlane.f32.xlu0 %v526
      %v528 = vpop.xlane.xlu0 %527
      %v529 = vsel %vm438, %v340, 0.0
      %530 = vadd.xlane.f32.xlu0 %v529
      %v531 = vpop.xlane.xlu0 %530
      %v532 = vsel %vm438, %v341, 0.0
      %533 = vadd.xlane.f32.xlu0 %v532
      %v534 = vpop.xlane.xlu0 %533
      %v535 = vsel %vm438, %v342, 0.0
      %536 = vadd.xlane.f32.xlu0 %v535
      %v537 = vpop.xlane.xlu0 %536
      %v538 = vsel %vm438, %v343, 0.0
      %539 = vadd.xlane.f32.xlu0 %v538
      %v540 = vpop.xlane.xlu0 %539
      %v541 = vsel %vm438, %v344, 0.0
      %542 = vadd.xlane.f32.xlu0 %v541
      %v543 = vpop.xlane.xlu0 %542
      %v544 = vsel %vm438, %v345, 0.0
      %545 = vadd.xlane.f32.xlu0 %v544
      %v546 = vpop.xlane.xlu0 %545
      %v547 = vsel %vm438, %v346, 0.0
      %548 = vadd.xlane.f32.xlu0 %v547
      %v549 = vpop.xlane.xlu0 %548
      %v550 = vsel %vm438, %v347, 0.0
      %551 = vadd.xlane.f32.xlu0 %v550
      %v552 = vpop.xlane.xlu0 %551
      %v553 = vsel %vm438, %v348, 0.0
      %554 = vadd.xlane.f32.xlu0 %v553
      %v555 = vpop.xlane.xlu0 %554
      %v556 = vsel %vm438, %v349, 0.0
      %557 = vadd.xlane.f32.xlu0 %v556
      %v558 = vpop.xlane.xlu0 %557
      %v559 = vsel %vm438, %v350, 0.0
      %560 = vadd.xlane.f32.xlu0 %v559
      %v561 = vpop.xlane.xlu0 %560
      %v562 = vsel %vm438, %v351, 0.0
      %563 = vadd.xlane.f32.xlu0 %v562
      %v564 = vpop.xlane.xlu0 %563
      %v565 = vsel %vm438, %v352, 0.0
      %566 = vadd.xlane.f32.xlu0 %v565
      %v567 = vpop.xlane.xlu0 %566
      %v568 = vsel %vm438, %v353, 0.0
      %569 = vadd.xlane.f32.xlu0 %v568
      %v570 = vpop.xlane.xlu0 %569
      %v571 = vsel %vm438, %v354, 0.0
      %572 = vadd.xlane.f32.xlu0 %v571
      %v573 = vpop.xlane.xlu0 %572
      %v574 = vsel %vm438, %v355, 0.0
      %575 = vadd.xlane.f32.xlu0 %v574
      %v576 = vpop.xlane.xlu0 %575
      %v577 = vsel %vm438, %v356, 0.0
      %578 = vadd.xlane.f32.xlu0 %v577
      %v579 = vpop.xlane.xlu0 %578
      %v580 = vsel %vm438, %v357, 0.0
      %581 = vadd.xlane.f32.xlu0 %v580
      %v582 = vpop.xlane.xlu0 %581
      %v583 = vsel %vm438, %v358, 0.0
      %584 = vadd.xlane.f32.xlu0 %v583
      %v585 = vpop.xlane.xlu0 %584
      %v586 = vsel %vm438, %v359, 0.0
      %587 = vadd.xlane.f32.xlu0 %v586
      %v588 = vpop.xlane.xlu0 %587
      %v589 = vsel %vm438, %v360, 0.0
      %590 = vadd.xlane.f32.xlu0 %v589
      %v591 = vpop.xlane.xlu0 %590
      %v592 = vsel %vm438, %v361, 0.0
      %593 = vadd.xlane.f32.xlu0 %v592
      %v594 = vpop.xlane.xlu0 %593
      %v595 = vsel %vm438, %v362, 0.0
      %596 = vadd.xlane.f32.xlu0 %v595
      %v597 = vpop.xlane.xlu0 %596
      %v598 = vsel %vm438, %v363, 0.0
      %599 = vadd.xlane.f32.xlu0 %v598
      %v600 = vpop.xlane.xlu0 %599
      %v601 = vsel %vm438, %v364, 0.0
      %602 = vadd.xlane.f32.xlu0 %v601
      %v603 = vpop.xlane.xlu0 %602
      %v604 = vsel %vm438, %v365, 0.0
      %605 = vadd.xlane.f32.xlu0 %v604
      %v606 = vpop.xlane.xlu0 %605
      %v607 = vsel %vm438, %v366, 0.0
      %608 = vadd.xlane.f32.xlu0 %v607
      %v609 = vpop.xlane.xlu0 %608
      %v610 = vsel %vm438, %v367, 0.0
      %611 = vadd.xlane.f32.xlu0 %v610
      %v612 = vpop.xlane.xlu0 %611
      %v613 = vsel %vm438, %v368, 0.0
      %614 = vadd.xlane.f32.xlu0 %v613
      %v615 = vpop.xlane.xlu0 %614
      %v616 = vsel %vm438, %v369, 0.0
      %617 = vadd.xlane.f32.xlu0 %v616
      %v618 = vpop.xlane.xlu0 %617
      %v619 = vsel %vm438, %v370, 0.0
      %620 = vadd.xlane.f32.xlu0 %v619
      %v621 = vpop.xlane.xlu0 %620
      %v622 = vsel %vm438, %v371, 0.0
      %623 = vadd.xlane.f32.xlu0 %v622
      %v624 = vpop.xlane.xlu0 %623
      %v625 = vsel %vm438, %v372, 0.0
      %626 = vadd.xlane.f32.xlu0 %v625
      %v627 = vpop.xlane.xlu0 %626
      %v628 = vsel %vm438, %v373, 0.0
      %629 = vadd.xlane.f32.xlu0 %v628
      %v630 = vpop.xlane.xlu0 %629
      %v631 = vsel %vm438, %v374, 0.0
      %632 = vadd.xlane.f32.xlu0 %v631
      %v633 = vpop.xlane.xlu0 %632
      %v634 = vsel %vm438, %v375, 0.0
      %635 = vadd.xlane.f32.xlu0 %v634
      %v636 = vpop.xlane.xlu0 %635
      %v637 = vsel %vm438, %v376, 0.0
      %638 = vadd.xlane.f32.xlu0 %v637
      %v639 = vpop.xlane.xlu0 %638
      %v640 = vsel %vm438, %v377, 0.0
      %641 = vadd.xlane.f32.xlu0 %v640
      %v642 = vpop.xlane.xlu0 %641
      %v643 = vsel %vm438, %v378, 0.0
      %644 = vadd.xlane.f32.xlu0 %v643
      %v645 = vpop.xlane.xlu0 %644
      %v646 = vsel %vm438, %v379, 0.0
      %647 = vadd.xlane.f32.xlu0 %v646
      %v648 = vpop.xlane.xlu0 %647
      %v649 = vsel %vm438, %v380, 0.0
      %650 = vadd.xlane.f32.xlu0 %v649
      %v651 = vpop.xlane.xlu0 %650
      %v652 = vsel %vm438, %v381, 0.0
      %653 = vadd.xlane.f32.xlu0 %v652
      %v654 = vpop.xlane.xlu0 %653
      %v655 = vsel %vm438, %v382, 0.0
      %656 = vadd.xlane.f32.xlu0 %v655
      %v657 = vpop.xlane.xlu0 %656
      %v658 = vsel %vm438, %v383, 0.0
      %659 = vadd.xlane.f32.xlu0 %v658
      %v660 = vpop.xlane.xlu0 %659
      %v661 = vsel %vm438, %v384, 0.0
      %662 = vadd.xlane.f32.xlu0 %v661
      %v663 = vpop.xlane.xlu0 %662
      %v664 = vsel %vm438, %v385, 0.0
      %665 = vadd.xlane.f32.xlu0 %v664
      %v666 = vpop.xlane.xlu0 %665
      %v667 = vsel %vm438, %v386, 0.0
      %668 = vadd.xlane.f32.xlu0 %v667
      %v669 = vpop.xlane.xlu0 %668
      %v670 = vsel %vm438, %v387, 0.0
      %671 = vadd.xlane.f32.xlu0 %v670
      %v672 = vpop.xlane.xlu0 %671
      %v673 = vsel %vm438, %v388, 0.0
      %674 = vadd.xlane.f32.xlu0 %v673
      %v675 = vpop.xlane.xlu0 %674
      %v676 = vsel %vm438, %v389, 0.0
      %677 = vadd.xlane.f32.xlu0 %v676
      %v678 = vpop.xlane.xlu0 %677
      %v679 = vsel %vm438, %v390, 0.0
      %680 = vadd.xlane.f32.xlu0 %v679
      %v681 = vpop.xlane.xlu0 %680
      %v682 = vsel %vm438, %v391, 0.0
      %683 = vadd.xlane.f32.xlu0 %v682
      %v684 = vpop.xlane.xlu0 %683
      %v685 = vsel %vm438, %v392, 0.0
      %686 = vadd.xlane.f32.xlu0 %v685
      %v687 = vpop.xlane.xlu0 %686
      %v688 = vsel %vm438, %v393, 0.0
      %689 = vadd.xlane.f32.xlu0 %v688
      %v690 = vpop.xlane.xlu0 %689
      %v691 = vsel %vm438, %v394, 0.0
      %692 = vadd.xlane.f32.xlu0 %v691
      %v693 = vpop.xlane.xlu0 %692
      %v694 = vsel %vm438, %v395, 0.0
      %695 = vadd.xlane.f32.xlu0 %v694
      %v696 = vpop.xlane.xlu0 %695
      %v697 = vsel %vm438, %v396, 0.0
      %698 = vadd.xlane.f32.xlu0 %v697
      %v699 = vpop.xlane.xlu0 %698
      %v700 = vsel %vm438, %v397, 0.0
      %701 = vadd.xlane.f32.xlu0 %v700
      %v702 = vpop.xlane.xlu0 %701
      %v703 = vsel %vm438, %v398, 0.0
      %704 = vadd.xlane.f32.xlu0 %v703
      %v705 = vpop.xlane.xlu0 %704
      %v706 = vsel %vm438, %v399, 0.0
      %707 = vadd.xlane.f32.xlu0 %v706
      %v708 = vpop.xlane.xlu0 %707
      %v709 = vsel %vm438, %v400, 0.0
      %710 = vadd.xlane.f32.xlu0 %v709
      %v711 = vpop.xlane.xlu0 %710
      %v712 = vsel %vm438, %v401, 0.0
      %713 = vadd.xlane.f32.xlu0 %v712
      %v714 = vpop.xlane.xlu0 %713
      %v715 = vsel %vm438, %v402, 0.0
      %716 = vadd.xlane.f32.xlu0 %v715
      %v717 = vpop.xlane.xlu0 %716
      %v718 = vsel %vm438, %v403, 0.0
      %719 = vadd.xlane.f32.xlu0 %v718
      %v720 = vpop.xlane.xlu0 %719
      %v721 = vsel %vm438, %v404, 0.0
      %722 = vadd.xlane.f32.xlu0 %v721
      %v723 = vpop.xlane.xlu0 %722
      %v724 = vsel %vm438, %v405, 0.0
      %725 = vadd.xlane.f32.xlu0 %v724
      %v726 = vpop.xlane.xlu0 %725
      %v727 = vsel %vm438, %v406, 0.0
      %728 = vadd.xlane.f32.xlu0 %v727
      %v729 = vpop.xlane.xlu0 %728
      %v730 = vsel %vm438, %v407, 0.0
      %731 = vadd.xlane.f32.xlu0 %v730
      %v732 = vpop.xlane.xlu0 %731
      %v733 = vsel %vm438, %v408, 0.0
      %734 = vadd.xlane.f32.xlu0 %v733
      %v735 = vpop.xlane.xlu0 %734
      %v736 = vsel %vm438, %v409, 0.0
      %737 = vadd.xlane.f32.xlu0 %v736
      %v738 = vpop.xlane.xlu0 %737
      %v739 = vsel %vm438, %v410, 0.0
      %740 = vadd.xlane.f32.xlu0 %v739
      %v741 = vpop.xlane.xlu0 %740
      %v742 = vsel %vm438, %v411, 0.0
      %743 = vadd.xlane.f32.xlu0 %v742
      %v744 = vpop.xlane.xlu0 %743
      %v745 = vsel %vm438, %v412, 0.0
      %746 = vadd.xlane.f32.xlu0 %v745
      %v747 = vpop.xlane.xlu0 %746
      %v748 = vsel %vm438, %v413, 0.0
      %749 = vadd.xlane.f32.xlu0 %v748
      %v750 = vpop.xlane.xlu0 %749
      %v751 = vsel %vm438, %v414, 0.0
      %752 = vadd.xlane.f32.xlu0 %v751
      %v753 = vpop.xlane.xlu0 %752
      %v754 = vsel %vm438, %v415, 0.0
      %755 = vadd.xlane.f32.xlu0 %v754
      %v756 = vpop.xlane.xlu0 %755
      %v757 = vsel %vm438, %v416, 0.0
      %758 = vadd.xlane.f32.xlu0 %v757
      %v759 = vpop.xlane.xlu0 %758
      %v760 = vsel %vm438, %v417, 0.0
      %761 = vadd.xlane.f32.xlu0 %v760
      %v762 = vpop.xlane.xlu0 %761
      %v763 = vsel %vm438, %v418, 0.0
      %764 = vadd.xlane.f32.xlu0 %v763
      %v765 = vpop.xlane.xlu0 %764
      %v766 = vsel %vm438, %v419, 0.0
      %767 = vadd.xlane.f32.xlu0 %v766
      %v768 = vpop.xlane.xlu0 %767
      %v769 = vsel %vm438, %v420, 0.0
      %770 = vadd.xlane.f32.xlu0 %v769
      %v771 = vpop.xlane.xlu0 %770
      %v772 = vsel %vm438, %v421, 0.0
      %773 = vadd.xlane.f32.xlu0 %v772
      %v774 = vpop.xlane.xlu0 %773
      %v775 = vsel %vm438, %v422, 0.0
      %776 = vadd.xlane.f32.xlu0 %v775
      %v777 = vpop.xlane.xlu0 %776
      %v778 = vsel %vm438, %v423, 0.0
      %779 = vadd.xlane.f32.xlu0 %v778
      %v780 = vpop.xlane.xlu0 %779
      %v781 = vsel %vm438, %v424, 0.0
      %782 = vadd.xlane.f32.xlu0 %v781
      %v783 = vpop.xlane.xlu0 %782
      %v784 = vsel %vm438, %v425, 0.0
      %785 = vadd.xlane.f32.xlu0 %v784
      %v786 = vpop.xlane.xlu0 %785
      %v787 = vsel %vm438, %v426, 0.0
      %788 = vadd.xlane.f32.xlu0 %v787
      %v789 = vpop.xlane.xlu0 %788
      %v790 = vsel %vm438, %v427, 0.0
      %791 = vadd.xlane.f32.xlu0 %v790
      %v792 = vpop.xlane.xlu0 %791
      %v793 = vsel %vm438, %v428, 0.0
      %794 = vadd.xlane.f32.xlu0 %v793
      %v795 = vpop.xlane.xlu0 %794
      %v796 = vsel %vm438, %v429, 0.0
      %797 = vadd.xlane.f32.xlu0 %v796
      %v798 = vpop.xlane.xlu0 %797
      %v799 = vsel %vm438, %v430, 0.0
      %800 = vadd.xlane.f32.xlu0 %v799
      %v801 = vpop.xlane.xlu0 %800
      %v802 = vsel %vm438, %v431, 0.0
      %803 = vadd.xlane.f32.xlu0 %v802
      %v804 = vpop.xlane.xlu0 %803
      %v805 = vsel %vm438, %v432, 0.0
      %806 = vadd.xlane.f32.xlu0 %v805
      %v807 = vpop.xlane.xlu0 %806
      %v808 = vsel %vm438, %v433, 0.0
      %809 = vadd.xlane.f32.xlu0 %v808
      %v810 = vpop.xlane.xlu0 %809
      %v811 = vsel %vm438, %v434, 0.0
      %812 = vadd.xlane.f32.xlu0 %v811
      %v813 = vpop.xlane.xlu0 %812
      %v814 = vsel %vm438, %v435, 0.0
      %815 = vadd.xlane.f32.xlu0 %v814
      %v816 = vpop.xlane.xlu0 %815
      %v817 = vsel %vm438, %v436, 0.0
      %818 = vadd.xlane.f32.xlu0 %v817
      %v819 = vpop.xlane.xlu0 %818
      %v820 = vsel %vm438, %v437, 0.0
      %821 = vadd.xlane.f32.xlu0 %v820
      %v822 = vpop.xlane.xlu0 %821
      %s823 = sld [smem:[#allocation2]]
      %v824 = vstv %s823
      %v825 = vadd.f32 %v441, %v824
      %v826 = vadd.f32 %v444, %v824
      %v827 = vadd.f32 %v447, %v824
      %v828 = vadd.f32 %v450, %v824
      %v829 = vadd.f32 %v453, %v824
      %v830 = vadd.f32 %v456, %v824
      %v831 = vadd.f32 %v459, %v824
      %v832 = vadd.f32 %v462, %v824
      %v833 = vadd.f32 %v465, %v824
      %v834 = vadd.f32 %v468, %v824
      %v835 = vadd.f32 %v471, %v824
      %v836 = vadd.f32 %v474, %v824
      %v837 = vadd.f32 %v477, %v824
      %v838 = vadd.f32 %v480, %v824
      %v839 = vadd.f32 %v483, %v824
      %v840 = vadd.f32 %v486, %v824
      %v841 = vadd.f32 %v489, %v824
      %v842 = vadd.f32 %v492, %v824
      %v843 = vadd.f32 %v495, %v824
      %v844 = vadd.f32 %v498, %v824
      %v845 = vadd.f32 %v501, %v824
      %v846 = vadd.f32 %v504, %v824
      %v847 = vadd.f32 %v507, %v824
      %v848 = vadd.f32 %v510, %v824
      %v849 = vadd.f32 %v513, %v824
      %v850 = vadd.f32 %v516, %v824
      %v851 = vadd.f32 %v519, %v824
      %v852 = vadd.f32 %v522, %v824
      %v853 = vadd.f32 %v525, %v824
      %v854 = vadd.f32 %v528, %v824
      %v855 = vadd.f32 %v531, %v824
      %v856 = vadd.f32 %v534, %v824
      %v857 = vadd.f32 %v537, %v824
      %v858 = vadd.f32 %v540, %v824
      %v859 = vadd.f32 %v543, %v824
      %v860 = vadd.f32 %v546, %v824
      %v861 = vadd.f32 %v549, %v824
      %v862 = vadd.f32 %v552, %v824
      %v863 = vadd.f32 %v555, %v824
      %v864 = vadd.f32 %v558, %v824
      %v865 = vadd.f32 %v561, %v824
      %v866 = vadd.f32 %v564, %v824
      %v867 = vadd.f32 %v567, %v824
      %v868 = vadd.f32 %v570, %v824
      %v869 = vadd.f32 %v573, %v824
      %v870 = vadd.f32 %v576, %v824
      %v871 = vadd.f32 %v579, %v824
      %v872 = vadd.f32 %v582, %v824
      %v873 = vadd.f32 %v585, %v824
      %v874 = vadd.f32 %v588, %v824
      %v875 = vadd.f32 %v591, %v824
      %v876 = vadd.f32 %v594, %v824
      %v877 = vadd.f32 %v597, %v824
      %v878 = vadd.f32 %v600, %v824
      %v879 = vadd.f32 %v603, %v824
      %v880 = vadd.f32 %v606, %v824
      %v881 = vadd.f32 %v609, %v824
      %v882 = vadd.f32 %v612, %v824
      %v883 = vadd.f32 %v615, %v824
      %v884 = vadd.f32 %v618, %v824
      %v885 = vadd.f32 %v621, %v824
      %v886 = vadd.f32 %v624, %v824
      %v887 = vadd.f32 %v627, %v824
      %v888 = vadd.f32 %v630, %v824
      %v889 = vadd.f32 %v633, %v824
      %v890 = vadd.f32 %v636, %v824
      %v891 = vadd.f32 %v639, %v824
      %v892 = vadd.f32 %v642, %v824
      %v893 = vadd.f32 %v645, %v824
      %v894 = vadd.f32 %v648, %v824
      %v895 = vadd.f32 %v651, %v824
      %v896 = vadd.f32 %v654, %v824
      %v897 = vadd.f32 %v657, %v824
      %v898 = vadd.f32 %v660, %v824
      %v899 = vadd.f32 %v663, %v824
      %v900 = vadd.f32 %v666, %v824
      %v901 = vadd.f32 %v669, %v824
      %v902 = vadd.f32 %v672, %v824
      %v903 = vadd.f32 %v675, %v824
      %v904 = vadd.f32 %v678, %v824
      %v905 = vadd.f32 %v681, %v824
      %v906 = vadd.f32 %v684, %v824
      %v907 = vadd.f32 %v687, %v824
      %v908 = vadd.f32 %v690, %v824
      %v909 = vadd.f32 %v693, %v824
      %v910 = vadd.f32 %v696, %v824
      %v911 = vadd.f32 %v699, %v824
      %v912 = vadd.f32 %v702, %v824
      %v913 = vadd.f32 %v705, %v824
      %v914 = vadd.f32 %v708, %v824
      %v915 = vadd.f32 %v711, %v824
      %v916 = vadd.f32 %v714, %v824
      %v917 = vadd.f32 %v717, %v824
      %v918 = vadd.f32 %v720, %v824
      %v919 = vadd.f32 %v723, %v824
      %v920 = vadd.f32 %v726, %v824
      %v921 = vadd.f32 %v729, %v824
      %v922 = vadd.f32 %v732, %v824
      %v923 = vadd.f32 %v735, %v824
      %v924 = vadd.f32 %v738, %v824
      %v925 = vadd.f32 %v741, %v824
      %v926 = vadd.f32 %v744, %v824
      %v927 = vadd.f32 %v747, %v824
      %v928 = vadd.f32 %v750, %v824
      %v929 = vadd.f32 %v753, %v824
      %v930 = vadd.f32 %v756, %v824
      %v931 = vadd.f32 %v759, %v824
      %v932 = vadd.f32 %v762, %v824
      %v933 = vadd.f32 %v765, %v824
      %v934 = vadd.f32 %v768, %v824
      %v935 = vadd.f32 %v771, %v824
      %v936 = vadd.f32 %v774, %v824
      %v937 = vadd.f32 %v777, %v824
      %v938 = vadd.f32 %v780, %v824
      %v939 = vadd.f32 %v783, %v824
      %v940 = vadd.f32 %v786, %v824
      %v941 = vadd.f32 %v789, %v824
      %v942 = vadd.f32 %v792, %v824
      %v943 = vadd.f32 %v795, %v824
      %v944 = vadd.f32 %v798, %v824
      %v945 = vadd.f32 %v801, %v824
      %v946 = vadd.f32 %v804, %v824
      %v947 = vadd.f32 %v807, %v824
      %v948 = vadd.f32 %v810, %v824
      %v949 = vadd.f32 %v813, %v824
      %v950 = vadd.f32 %v816, %v824
      %v951 = vadd.f32 %v819, %v824
      %v952 = vadd.f32 %v822, %v824
      %v953 = vsub.f32 0.0, %v825
      %v954 = vsub.f32 0.0, %v826
      %v955 = vsub.f32 0.0, %v827
      %v956 = vsub.f32 0.0, %v828
      %v957 = vsub.f32 0.0, %v829
      %v958 = vsub.f32 0.0, %v830
      %v959 = vsub.f32 0.0, %v831
      %v960 = vsub.f32 0.0, %v832
      %v961 = vsub.f32 0.0, %v833
      %v962 = vsub.f32 0.0, %v834
      %v963 = vsub.f32 0.0, %v835
      %v964 = vsub.f32 0.0, %v836
      %v965 = vsub.f32 0.0, %v837
      %v966 = vsub.f32 0.0, %v838
      %v967 = vsub.f32 0.0, %v839
      %v968 = vsub.f32 0.0, %v840
      %v969 = vsub.f32 0.0, %v841
      %v970 = vsub.f32 0.0, %v842
      %v971 = vsub.f32 0.0, %v843
      %v972 = vsub.f32 0.0, %v844
      %v973 = vsub.f32 0.0, %v845
      %v974 = vsub.f32 0.0, %v846
      %v975 = vsub.f32 0.0, %v847
      %v976 = vsub.f32 0.0, %v848
      %v977 = vsub.f32 0.0, %v849
      %v978 = vsub.f32 0.0, %v850
      %v979 = vsub.f32 0.0, %v851
      %v980 = vsub.f32 0.0, %v852
      %v981 = vsub.f32 0.0, %v853
      %v982 = vsub.f32 0.0, %v854
      %v983 = vsub.f32 0.0, %v855
      %v984 = vsub.f32 0.0, %v856
      %v985 = vsub.f32 0.0, %v857
      %v986 = vsub.f32 0.0, %v858
      %v987 = vsub.f32 0.0, %v859
      %v988 = vsub.f32 0.0, %v860
      %v989 = vsub.f32 0.0, %v861
      %v990 = vsub.f32 0.0, %v862
      %v991 = vsub.f32 0.0, %v863
      %v992 = vsub.f32 0.0, %v864
      %v993 = vsub.f32 0.0, %v865
      %v994 = vsub.f32 0.0, %v866
      %v995 = vsub.f32 0.0, %v867
      %v996 = vsub.f32 0.0, %v868
      %v997 = vsub.f32 0.0, %v869
      %v998 = vsub.f32 0.0, %v870
      %v999 = vsub.f32 0.0, %v871
      %v1000 = vsub.f32 0.0, %v872
      %v1001 = vsub.f32 0.0, %v873
      %v1002 = vsub.f32 0.0, %v874
      %v1003 = vsub.f32 0.0, %v875
      %v1004 = vsub.f32 0.0, %v876
      %v1005 = vsub.f32 0.0, %v877
      %v1006 = vsub.f32 0.0, %v878
      %v1007 = vsub.f32 0.0, %v879
      %v1008 = vsub.f32 0.0, %v880
      %v1009 = vsub.f32 0.0, %v881
      %v1010 = vsub.f32 0.0, %v882
      %v1011 = vsub.f32 0.0, %v883
      %v1012 = vsub.f32 0.0, %v884
      %v1013 = vsub.f32 0.0, %v885
      %v1014 = vsub.f32 0.0, %v886
      %v1015 = vsub.f32 0.0, %v887
      %v1016 = vsub.f32 0.0, %v888
      %v1017 = vsub.f32 0.0, %v889
      %v1018 = vsub.f32 0.0, %v890
      %v1019 = vsub.f32 0.0, %v891
      %v1020 = vsub.f32 0.0, %v892
      %v1021 = vsub.f32 0.0, %v893
      %v1022 = vsub.f32 0.0, %v894
      %v1023 = vsub.f32 0.0, %v895
      %v1024 = vsub.f32 0.0, %v896
      %v1025 = vsub.f32 0.0, %v897
      %v1026 = vsub.f32 0.0, %v898
      %v1027 = vsub.f32 0.0, %v899
      %v1028 = vsub.f32 0.0, %v900
      %v1029 = vsub.f32 0.0, %v901
      %v1030 = vsub.f32 0.0, %v902
      %v1031 = vsub.f32 0.0, %v903
      %v1032 = vsub.f32 0.0, %v904
      %v1033 = vsub.f32 0.0, %v905
      %v1034 = vsub.f32 0.0, %v906
      %v1035 = vsub.f32 0.0, %v907
      %v1036 = vsub.f32 0.0, %v908
      %v1037 = vsub.f32 0.0, %v909
      %v1038 = vsub.f32 0.0, %v910
      %v1039 = vsub.f32 0.0, %v911
      %v1040 = vsub.f32 0.0, %v912
      %v1041 = vsub.f32 0.0, %v913
      %v1042 = vsub.f32 0.0, %v914
      %v1043 = vsub.f32 0.0, %v915
      %v1044 = vsub.f32 0.0, %v916
      %v1045 = vsub.f32 0.0, %v917
      %v1046 = vsub.f32 0.0, %v918
      %v1047 = vsub.f32 0.0, %v919
      %v1048 = vsub.f32 0.0, %v920
      %v1049 = vsub.f32 0.0, %v921
      %v1050 = vsub.f32 0.0, %v922
      %v1051 = vsub.f32 0.0, %v923
      %v1052 = vsub.f32 0.0, %v924
      %v1053 = vsub.f32 0.0, %v925
      %v1054 = vsub.f32 0.0, %v926
      %v1055 = vsub.f32 0.0, %v927
      %v1056 = vsub.f32 0.0, %v928
      %v1057 = vsub.f32 0.0, %v929
      %v1058 = vsub.f32 0.0, %v930
      %v1059 = vsub.f32 0.0, %v931
      %v1060 = vsub.f32 0.0, %v932
      %v1061 = vsub.f32 0.0, %v933
      %v1062 = vsub.f32 0.0, %v934
      %v1063 = vsub.f32 0.0, %v935
      %v1064 = vsub.f32 0.0, %v936
      %v1065 = vsub.f32 0.0, %v937
      %v1066 = vsub.f32 0.0, %v938
      %v1067 = vsub.f32 0.0, %v939
      %v1068 = vsub.f32 0.0, %v940
      %v1069 = vsub.f32 0.0, %v941
      %v1070 = vsub.f32 0.0, %v942
      %v1071 = vsub.f32 0.0, %v943
      %v1072 = vsub.f32 0.0, %v944
      %v1073 = vsub.f32 0.0, %v945
      %v1074 = vsub.f32 0.0, %v946
      %v1075 = vsub.f32 0.0, %v947
      %v1076 = vsub.f32 0.0, %v948
      %v1077 = vsub.f32 0.0, %v949
      %v1078 = vsub.f32 0.0, %v950
      %v1079 = vsub.f32 0.0, %v951
      %v1080 = vsub.f32 0.0, %v952
      %v1081 = vmul.f32 %v953, 1.442695
      %v1082 = vpow.pop %v1081
      %v1083 = vmul.f32 %v954, 1.442695
      %v1084 = vpow.pop %v1083
      %v1085 = vmul.f32 %v955, 1.442695
      %v1086 = vpow.pop %v1085
      %v1087 = vmul.f32 %v956, 1.442695
      %v1088 = vpow.pop %v1087
      %v1089 = vmul.f32 %v957, 1.442695
      %v1090 = vpow.pop %v1089
      %v1091 = vmul.f32 %v958, 1.442695
      %v1092 = vpow.pop %v1091
      %v1093 = vmul.f32 %v959, 1.442695
      %v1094 = vpow.pop %v1093
      %v1095 = vmul.f32 %v960, 1.442695
      %v1096 = vpow.pop %v1095
      %v1097 = vmul.f32 %v961, 1.442695
      %v1098 = vpow.pop %v1097
      %v1099 = vmul.f32 %v962, 1.442695
      %v1100 = vpow.pop %v1099
      %v1101 = vmul.f32 %v963, 1.442695
      %v1102 = vpow.pop %v1101
      %v1103 = vmul.f32 %v964, 1.442695
      %v1104 = vpow.pop %v1103
      %v1105 = vmul.f32 %v965, 1.442695
      %v1106 = vpow.pop %v1105
      %v1107 = vmul.f32 %v966, 1.442695
      %v1108 = vpow.pop %v1107
      %v1109 = vmul.f32 %v967, 1.442695
      %v1110 = vpow.pop %v1109
      %v1111 = vmul.f32 %v968, 1.442695
      %v1112 = vpow.pop %v1111
      %v1113 = vmul.f32 %v969, 1.442695
      %v1114 = vpow.pop %v1113
      %v1115 = vmul.f32 %v970, 1.442695
      %v1116 = vpow.pop %v1115
      %v1117 = vmul.f32 %v971, 1.442695
      %v1118 = vpow.pop %v1117
      %v1119 = vmul.f32 %v972, 1.442695
      %v1120 = vpow.pop %v1119
      %v1121 = vmul.f32 %v973, 1.442695
      %v1122 = vpow.pop %v1121
      %v1123 = vmul.f32 %v974, 1.442695
      %v1124 = vpow.pop %v1123
      %v1125 = vmul.f32 %v975, 1.442695
      %v1126 = vpow.pop %v1125
      %v1127 = vmul.f32 %v976, 1.442695
      %v1128 = vpow.pop %v1127
      %v1129 = vmul.f32 %v977, 1.442695
      %v1130 = vpow.pop %v1129
      %v1131 = vmul.f32 %v978, 1.442695
      %v1132 = vpow.pop %v1131
      %v1133 = vmul.f32 %v979, 1.442695
      %v1134 = vpow.pop %v1133
      %v1135 = vmul.f32 %v980, 1.442695
      %v1136 = vpow.pop %v1135
      %v1137 = vmul.f32 %v981, 1.442695
      %v1138 = vpow.pop %v1137
      %v1139 = vmul.f32 %v982, 1.442695
      %v1140 = vpow.pop %v1139
      %v1141 = vmul.f32 %v983, 1.442695
      %v1142 = vpow.pop %v1141
      %v1143 = vmul.f32 %v984, 1.442695
      %v1144 = vpow.pop %v1143
      %v1145 = vmul.f32 %v985, 1.442695
      %v1146 = vpow.pop %v1145
      %v1147 = vmul.f32 %v986, 1.442695
      %v1148 = vpow.pop %v1147
      %v1149 = vmul.f32 %v987, 1.442695
      %v1150 = vpow.pop %v1149
      %v1151 = vmul.f32 %v988, 1.442695
      %v1152 = vpow.pop %v1151
      %v1153 = vmul.f32 %v989, 1.442695
      %v1154 = vpow.pop %v1153
      %v1155 = vmul.f32 %v990, 1.442695
      %v1156 = vpow.pop %v1155
      %v1157 = vmul.f32 %v991, 1.442695
      %v1158 = vpow.pop %v1157
      %v1159 = vmul.f32 %v992, 1.442695
      %v1160 = vpow.pop %v1159
      %v1161 = vmul.f32 %v993, 1.442695
      %v1162 = vpow.pop %v1161
      %v1163 = vmul.f32 %v994, 1.442695
      %v1164 = vpow.pop %v1163
      %v1165 = vmul.f32 %v995, 1.442695
      %v1166 = vpow.pop %v1165
      %v1167 = vmul.f32 %v996, 1.442695
      %v1168 = vpow.pop %v1167
      %v1169 = vmul.f32 %v997, 1.442695
      %v1170 = vpow.pop %v1169
      %v1171 = vmul.f32 %v998, 1.442695
      %v1172 = vpow.pop %v1171
      %v1173 = vmul.f32 %v999, 1.442695
      %v1174 = vpow.pop %v1173
      %v1175 = vmul.f32 %v1000, 1.442695
      %v1176 = vpow.pop %v1175
      %v1177 = vmul.f32 %v1001, 1.442695
      %v1178 = vpow.pop %v1177
      %v1179 = vmul.f32 %v1002, 1.442695
      %v1180 = vpow.pop %v1179
      %v1181 = vmul.f32 %v1003, 1.442695
      %v1182 = vpow.pop %v1181
      %v1183 = vmul.f32 %v1004, 1.442695
      %v1184 = vpow.pop %v1183
      %v1185 = vmul.f32 %v1005, 1.442695
      %v1186 = vpow.pop %v1185
      %v1187 = vmul.f32 %v1006, 1.442695
      %v1188 = vpow.pop %v1187
      %v1189 = vmul.f32 %v1007, 1.442695
      %v1190 = vpow.pop %v1189
      %v1191 = vmul.f32 %v1008, 1.442695
      %v1192 = vpow.pop %v1191
      %v1193 = vmul.f32 %v1009, 1.442695
      %v1194 = vpow.pop %v1193
      %v1195 = vmul.f32 %v1010, 1.442695
      %v1196 = vpow.pop %v1195
      %v1197 = vmul.f32 %v1011, 1.442695
      %v1198 = vpow.pop %v1197
      %v1199 = vmul.f32 %v1012, 1.442695
      %v1200 = vpow.pop %v1199
      %v1201 = vmul.f32 %v1013, 1.442695
      %v1202 = vpow.pop %v1201
      %v1203 = vmul.f32 %v1014, 1.442695
      %v1204 = vpow.pop %v1203
      %v1205 = vmul.f32 %v1015, 1.442695
      %v1206 = vpow.pop %v1205
      %v1207 = vmul.f32 %v1016, 1.442695
      %v1208 = vpow.pop %v1207
      %v1209 = vmul.f32 %v1017, 1.442695
      %v1210 = vpow.pop %v1209
      %v1211 = vmul.f32 %v1018, 1.442695
      %v1212 = vpow.pop %v1211
      %v1213 = vmul.f32 %v1019, 1.442695
      %v1214 = vpow.pop %v1213
      %v1215 = vmul.f32 %v1020, 1.442695
      %v1216 = vpow.pop %v1215
      %v1217 = vmul.f32 %v1021, 1.442695
      %v1218 = vpow.pop %v1217
      %v1219 = vmul.f32 %v1022, 1.442695
      %v1220 = vpow.pop %v1219
      %v1221 = vmul.f32 %v1023, 1.442695
      %v1222 = vpow.pop %v1221
      %v1223 = vmul.f32 %v1024, 1.442695
      %v1224 = vpow.pop %v1223
      %v1225 = vmul.f32 %v1025, 1.442695
      %v1226 = vpow.pop %v1225
      %v1227 = vmul.f32 %v1026, 1.442695
      %v1228 = vpow.pop %v1227
      %v1229 = vmul.f32 %v1027, 1.442695
      %v1230 = vpow.pop %v1229
      %v1231 = vmul.f32 %v1028, 1.442695
      %v1232 = vpow.pop %v1231
      %v1233 = vmul.f32 %v1029, 1.442695
      %v1234 = vpow.pop %v1233
      %v1235 = vmul.f32 %v1030, 1.442695
      %v1236 = vpow.pop %v1235
      %v1237 = vmul.f32 %v1031, 1.442695
      %v1238 = vpow.pop %v1237
      %v1239 = vmul.f32 %v1032, 1.442695
      %v1240 = vpow.pop %v1239
      %v1241 = vmul.f32 %v1033, 1.442695
      %v1242 = vpow.pop %v1241
      %v1243 = vmul.f32 %v1034, 1.442695
      %v1244 = vpow.pop %v1243
      %v1245 = vmul.f32 %v1035, 1.442695
      %v1246 = vpow.pop %v1245
      %v1247 = vmul.f32 %v1036, 1.442695
      %v1248 = vpow.pop %v1247
      %v1249 = vmul.f32 %v1037, 1.442695
      %v1250 = vpow.pop %v1249
      %v1251 = vmul.f32 %v1038, 1.442695
      %v1252 = vpow.pop %v1251
      %v1253 = vmul.f32 %v1039, 1.442695
      %v1254 = vpow.pop %v1253
      %v1255 = vmul.f32 %v1040, 1.442695
      %v1256 = vpow.pop %v1255
      %v1257 = vmul.f32 %v1041, 1.442695
      %v1258 = vpow.pop %v1257
      %v1259 = vmul.f32 %v1042, 1.442695
      %v1260 = vpow.pop %v1259
      %v1261 = vmul.f32 %v1043, 1.442695
      %v1262 = vpow.pop %v1261
      %v1263 = vmul.f32 %v1044, 1.442695
      %v1264 = vpow.pop %v1263
      %v1265 = vmul.f32 %v1045, 1.442695
      %v1266 = vpow.pop %v1265
      %v1267 = vmul.f32 %v1046, 1.442695
      %v1268 = vpow.pop %v1267
      %v1269 = vmul.f32 %v1047, 1.442695
      %v1270 = vpow.pop %v1269
      %v1271 = vmul.f32 %v1048, 1.442695
      %v1272 = vpow.pop %v1271
      %v1273 = vmul.f32 %v1049, 1.442695
      %v1274 = vpow.pop %v1273
      %v1275 = vmul.f32 %v1050, 1.442695
      %v1276 = vpow.pop %v1275
      %v1277 = vmul.f32 %v1051, 1.442695
      %v1278 = vpow.pop %v1277
      %v1279 = vmul.f32 %v1052, 1.442695
      %v1280 = vpow.pop %v1279
      %v1281 = vmul.f32 %v1053, 1.442695
      %v1282 = vpow.pop %v1281
      %v1283 = vmul.f32 %v1054, 1.442695
      %v1284 = vpow.pop %v1283
      %v1285 = vmul.f32 %v1055, 1.442695
      %v1286 = vpow.pop %v1285
      %v1287 = vmul.f32 %v1056, 1.442695
      %v1288 = vpow.pop %v1287
      %v1289 = vmul.f32 %v1057, 1.442695
      %v1290 = vpow.pop %v1289
      %v1291 = vmul.f32 %v1058, 1.442695
      %v1292 = vpow.pop %v1291
      %v1293 = vmul.f32 %v1059, 1.442695
      %v1294 = vpow.pop %v1293
      %v1295 = vmul.f32 %v1060, 1.442695
      %v1296 = vpow.pop %v1295
      %v1297 = vmul.f32 %v1061, 1.442695
      %v1298 = vpow.pop %v1297
      %v1299 = vmul.f32 %v1062, 1.442695
      %v1300 = vpow.pop %v1299
      %v1301 = vmul.f32 %v1063, 1.442695
      %v1302 = vpow.pop %v1301
      %v1303 = vmul.f32 %v1064, 1.442695
      %v1304 = vpow.pop %v1303
      %v1305 = vmul.f32 %v1065, 1.442695
      %v1306 = vpow.pop %v1305
      %v1307 = vmul.f32 %v1066, 1.442695
      %v1308 = vpow.pop %v1307
      %v1309 = vmul.f32 %v1067, 1.442695
      %v1310 = vpow.pop %v1309
      %v1311 = vmul.f32 %v1068, 1.442695
      %v1312 = vpow.pop %v1311
      %v1313 = vmul.f32 %v1069, 1.442695
      %v1314 = vpow.pop %v1313
      %v1315 = vmul.f32 %v1070, 1.442695
      %v1316 = vpow.pop %v1315
      %v1317 = vmul.f32 %v1071, 1.442695
      %v1318 = vpow.pop %v1317
      %v1319 = vmul.f32 %v1072, 1.442695
      %v1320 = vpow.pop %v1319
      %v1321 = vmul.f32 %v1073, 1.442695
      %v1322 = vpow.pop %v1321
      %v1323 = vmul.f32 %v1074, 1.442695
      %v1324 = vpow.pop %v1323
      %v1325 = vmul.f32 %v1075, 1.442695
      %v1326 = vpow.pop %v1325
      %v1327 = vmul.f32 %v1076, 1.442695
      %v1328 = vpow.pop %v1327
      %v1329 = vmul.f32 %v1077, 1.442695
      %v1330 = vpow.pop %v1329
      %v1331 = vmul.f32 %v1078, 1.442695
      %v1332 = vpow.pop %v1331
      %v1333 = vmul.f32 %v1079, 1.442695
      %v1334 = vpow.pop %v1333
      %v1335 = vmul.f32 %v1080, 1.442695
      %v1336 = vpow.pop %v1335
      %v1337 = vadd.f32 %v1082, 1.0
      %v1338 = vadd.f32 %v1084, 1.0
      %v1339 = vadd.f32 %v1086, 1.0
      %v1340 = vadd.f32 %v1088, 1.0
      %v1341 = vadd.f32 %v1090, 1.0
      %v1342 = vadd.f32 %v1092, 1.0
      %v1343 = vadd.f32 %v1094, 1.0
      %v1344 = vadd.f32 %v1096, 1.0
      %v1345 = vadd.f32 %v1098, 1.0
      %v1346 = vadd.f32 %v1100, 1.0
      %v1347 = vadd.f32 %v1102, 1.0
      %v1348 = vadd.f32 %v1104, 1.0
      %v1349 = vadd.f32 %v1106, 1.0
      %v1350 = vadd.f32 %v1108, 1.0
      %v1351 = vadd.f32 %v1110, 1.0
      %v1352 = vadd.f32 %v1112, 1.0
      %v1353 = vadd.f32 %v1114, 1.0
      %v1354 = vadd.f32 %v1116, 1.0
      %v1355 = vadd.f32 %v1118, 1.0
      %v1356 = vadd.f32 %v1120, 1.0
      %v1357 = vadd.f32 %v1122, 1.0
      %v1358 = vadd.f32 %v1124, 1.0
      %v1359 = vadd.f32 %v1126, 1.0
      %v1360 = vadd.f32 %v1128, 1.0
      %v1361 = vadd.f32 %v1130, 1.0
      %v1362 = vadd.f32 %v1132, 1.0
      %v1363 = vadd.f32 %v1134, 1.0
      %v1364 = vadd.f32 %v1136, 1.0
      %v1365 = vadd.f32 %v1138, 1.0
      %v1366 = vadd.f32 %v1140, 1.0
      %v1367 = vadd.f32 %v1142, 1.0
      %v1368 = vadd.f32 %v1144, 1.0
      %v1369 = vadd.f32 %v1146, 1.0
      %v1370 = vadd.f32 %v1148, 1.0
      %v1371 = vadd.f32 %v1150, 1.0
      %v1372 = vadd.f32 %v1152, 1.0
      %v1373 = vadd.f32 %v1154, 1.0
      %v1374 = vadd.f32 %v1156, 1.0
      %v1375 = vadd.f32 %v1158, 1.0
      %v1376 = vadd.f32 %v1160, 1.0
      %v1377 = vadd.f32 %v1162, 1.0
      %v1378 = vadd.f32 %v1164, 1.0
      %v1379 = vadd.f32 %v1166, 1.0
      %v1380 = vadd.f32 %v1168, 1.0
      %v1381 = vadd.f32 %v1170, 1.0
      %v1382 = vadd.f32 %v1172, 1.0
      %v1383 = vadd.f32 %v1174, 1.0
      %v1384 = vadd.f32 %v1176, 1.0
      %v1385 = vadd.f32 %v1178, 1.0
      %v1386 = vadd.f32 %v1180, 1.0
      %v1387 = vadd.f32 %v1182, 1.0
      %v1388 = vadd.f32 %v1184, 1.0
      %v1389 = vadd.f32 %v1186, 1.0
      %v1390 = vadd.f32 %v1188, 1.0
      %v1391 = vadd.f32 %v1190, 1.0
      %v1392 = vadd.f32 %v1192, 1.0
      %v1393 = vadd.f32 %v1194, 1.0
      %v1394 = vadd.f32 %v1196, 1.0
      %v1395 = vadd.f32 %v1198, 1.0
      %v1396 = vadd.f32 %v1200, 1.0
      %v1397 = vadd.f32 %v1202, 1.0
      %v1398 = vadd.f32 %v1204, 1.0
      %v1399 = vadd.f32 %v1206, 1.0
      %v1400 = vadd.f32 %v1208, 1.0
      %v1401 = vadd.f32 %v1210, 1.0
      %v1402 = vadd.f32 %v1212, 1.0
      %v1403 = vadd.f32 %v1214, 1.0
      %v1404 = vadd.f32 %v1216, 1.0
      %v1405 = vadd.f32 %v1218, 1.0
      %v1406 = vadd.f32 %v1220, 1.0
      %v1407 = vadd.f32 %v1222, 1.0
      %v1408 = vadd.f32 %v1224, 1.0
      %v1409 = vadd.f32 %v1226, 1.0
      %v1410 = vadd.f32 %v1228, 1.0
      %v1411 = vadd.f32 %v1230, 1.0
      %v1412 = vadd.f32 %v1232, 1.0
      %v1413 = vadd.f32 %v1234, 1.0
      %v1414 = vadd.f32 %v1236, 1.0
      %v1415 = vadd.f32 %v1238, 1.0
      %v1416 = vadd.f32 %v1240, 1.0
      %v1417 = vadd.f32 %v1242, 1.0
      %v1418 = vadd.f32 %v1244, 1.0
      %v1419 = vadd.f32 %v1246, 1.0
      %v1420 = vadd.f32 %v1248, 1.0
      %v1421 = vadd.f32 %v1250, 1.0
      %v1422 = vadd.f32 %v1252, 1.0
      %v1423 = vadd.f32 %v1254, 1.0
      %v1424 = vadd.f32 %v1256, 1.0
      %v1425 = vadd.f32 %v1258, 1.0
      %v1426 = vadd.f32 %v1260, 1.0
      %v1427 = vadd.f32 %v1262, 1.0
      %v1428 = vadd.f32 %v1264, 1.0
      %v1429 = vadd.f32 %v1266, 1.0
      %v1430 = vadd.f32 %v1268, 1.0
      %v1431 = vadd.f32 %v1270, 1.0
      %v1432 = vadd.f32 %v1272, 1.0
      %v1433 = vadd.f32 %v1274, 1.0
      %v1434 = vadd.f32 %v1276, 1.0
      %v1435 = vadd.f32 %v1278, 1.0
      %v1436 = vadd.f32 %v1280, 1.0
      %v1437 = vadd.f32 %v1282, 1.0
      %v1438 = vadd.f32 %v1284, 1.0
      %v1439 = vadd.f32 %v1286, 1.0
      %v1440 = vadd.f32 %v1288, 1.0
      %v1441 = vadd.f32 %v1290, 1.0
      %v1442 = vadd.f32 %v1292, 1.0
      %v1443 = vadd.f32 %v1294, 1.0
      %v1444 = vadd.f32 %v1296, 1.0
      %v1445 = vadd.f32 %v1298, 1.0
      %v1446 = vadd.f32 %v1300, 1.0
      %v1447 = vadd.f32 %v1302, 1.0
      %v1448 = vadd.f32 %v1304, 1.0
      %v1449 = vadd.f32 %v1306, 1.0
      %v1450 = vadd.f32 %v1308, 1.0
      %v1451 = vadd.f32 %v1310, 1.0
      %v1452 = vadd.f32 %v1312, 1.0
      %v1453 = vadd.f32 %v1314, 1.0
      %v1454 = vadd.f32 %v1316, 1.0
      %v1455 = vadd.f32 %v1318, 1.0
      %v1456 = vadd.f32 %v1320, 1.0
      %v1457 = vadd.f32 %v1322, 1.0
      %v1458 = vadd.f32 %v1324, 1.0
      %v1459 = vadd.f32 %v1326, 1.0
      %v1460 = vadd.f32 %v1328, 1.0
      %v1461 = vadd.f32 %v1330, 1.0
      %v1462 = vadd.f32 %v1332, 1.0
      %v1463 = vadd.f32 %v1334, 1.0
      %v1464 = vadd.f32 %v1336, 1.0
      %v1465 = vrcp.pop %v1337
      %v1466 = vmul.f32 1.0, %v1465
      %v1467 = vrcp.pop %v1338
      %v1468 = vmul.f32 1.0, %v1467
      %v1469 = vrcp.pop %v1339
      %v1470 = vmul.f32 1.0, %v1469
      %v1471 = vrcp.pop %v1340
      %v1472 = vmul.f32 1.0, %v1471
      %v1473 = vrcp.pop %v1341
      %v1474 = vmul.f32 1.0, %v1473
      %v1475 = vrcp.pop %v1342
      %v1476 = vmul.f32 1.0, %v1475
      %v1477 = vrcp.pop %v1343
      %v1478 = vmul.f32 1.0, %v1477
      %v1479 = vrcp.pop %v1344
      %v1480 = vmul.f32 1.0, %v1479
      %v1481 = vrcp.pop %v1345
      %v1482 = vmul.f32 1.0, %v1481
      %v1483 = vrcp.pop %v1346
      %v1484 = vmul.f32 1.0, %v1483
      %v1485 = vrcp.pop %v1347
      %v1486 = vmul.f32 1.0, %v1485
      %v1487 = vrcp.pop %v1348
      %v1488 = vmul.f32 1.0, %v1487
      %v1489 = vrcp.pop %v1349
      %v1490 = vmul.f32 1.0, %v1489
      %v1491 = vrcp.pop %v1350
      %v1492 = vmul.f32 1.0, %v1491
      %v1493 = vrcp.pop %v1351
      %v1494 = vmul.f32 1.0, %v1493
      %v1495 = vrcp.pop %v1352
      %v1496 = vmul.f32 1.0, %v1495
      %v1497 = vrcp.pop %v1353
      %v1498 = vmul.f32 1.0, %v1497
      %v1499 = vrcp.pop %v1354
      %v1500 = vmul.f32 1.0, %v1499
      %v1501 = vrcp.pop %v1355
      %v1502 = vmul.f32 1.0, %v1501
      %v1503 = vrcp.pop %v1356
      %v1504 = vmul.f32 1.0, %v1503
      %v1505 = vrcp.pop %v1357
      %v1506 = vmul.f32 1.0, %v1505
      %v1507 = vrcp.pop %v1358
      %v1508 = vmul.f32 1.0, %v1507
      %v1509 = vrcp.pop %v1359
      %v1510 = vmul.f32 1.0, %v1509
      %v1511 = vrcp.pop %v1360
      %v1512 = vmul.f32 1.0, %v1511
      %v1513 = vrcp.pop %v1361
      %v1514 = vmul.f32 1.0, %v1513
      %v1515 = vrcp.pop %v1362
      %v1516 = vmul.f32 1.0, %v1515
      %v1517 = vrcp.pop %v1363
      %v1518 = vmul.f32 1.0, %v1517
      %v1519 = vrcp.pop %v1364
      %v1520 = vmul.f32 1.0, %v1519
      %v1521 = vrcp.pop %v1365
      %v1522 = vmul.f32 1.0, %v1521
      %v1523 = vrcp.pop %v1366
      %v1524 = vmul.f32 1.0, %v1523
      %v1525 = vrcp.pop %v1367
      %v1526 = vmul.f32 1.0, %v1525
      %v1527 = vrcp.pop %v1368
      %v1528 = vmul.f32 1.0, %v1527
      %v1529 = vrcp.pop %v1369
      %v1530 = vmul.f32 1.0, %v1529
      %v1531 = vrcp.pop %v1370
      %v1532 = vmul.f32 1.0, %v1531
      %v1533 = vrcp.pop %v1371
      %v1534 = vmul.f32 1.0, %v1533
      %v1535 = vrcp.pop %v1372
      %v1536 = vmul.f32 1.0, %v1535
      %v1537 = vrcp.pop %v1373
      %v1538 = vmul.f32 1.0, %v1537
      %v1539 = vrcp.pop %v1374
      %v1540 = vmul.f32 1.0, %v1539
      %v1541 = vrcp.pop %v1375
      %v1542 = vmul.f32 1.0, %v1541
      %v1543 = vrcp.pop %v1376
      %v1544 = vmul.f32 1.0, %v1543
      %v1545 = vrcp.pop %v1377
      %v1546 = vmul.f32 1.0, %v1545
      %v1547 = vrcp.pop %v1378
      %v1548 = vmul.f32 1.0, %v1547
      %v1549 = vrcp.pop %v1379
      %v1550 = vmul.f32 1.0, %v1549
      %v1551 = vrcp.pop %v1380
      %v1552 = vmul.f32 1.0, %v1551
      %v1553 = vrcp.pop %v1381
      %v1554 = vmul.f32 1.0, %v1553
      %v1555 = vrcp.pop %v1382
      %v1556 = vmul.f32 1.0, %v1555
      %v1557 = vrcp.pop %v1383
      %v1558 = vmul.f32 1.0, %v1557
      %v1559 = vrcp.pop %v1384
      %v1560 = vmul.f32 1.0, %v1559
      %v1561 = vrcp.pop %v1385
      %v1562 = vmul.f32 1.0, %v1561
      %v1563 = vrcp.pop %v1386
      %v1564 = vmul.f32 1.0, %v1563
      %v1565 = vrcp.pop %v1387
      %v1566 = vmul.f32 1.0, %v1565
      %v1567 = vrcp.pop %v1388
      %v1568 = vmul.f32 1.0, %v1567
      %v1569 = vrcp.pop %v1389
      %v1570 = vmul.f32 1.0, %v1569
      %v1571 = vrcp.pop %v1390
      %v1572 = vmul.f32 1.0, %v1571
      %v1573 = vrcp.pop %v1391
      %v1574 = vmul.f32 1.0, %v1573
      %v1575 = vrcp.pop %v1392
      %v1576 = vmul.f32 1.0, %v1575
      %v1577 = vrcp.pop %v1393
      %v1578 = vmul.f32 1.0, %v1577
      %v1579 = vrcp.pop %v1394
      %v1580 = vmul.f32 1.0, %v1579
      %v1581 = vrcp.pop %v1395
      %v1582 = vmul.f32 1.0, %v1581
      %v1583 = vrcp.pop %v1396
      %v1584 = vmul.f32 1.0, %v1583
      %v1585 = vrcp.pop %v1397
      %v1586 = vmul.f32 1.0, %v1585
      %v1587 = vrcp.pop %v1398
      %v1588 = vmul.f32 1.0, %v1587
      %v1589 = vrcp.pop %v1399
      %v1590 = vmul.f32 1.0, %v1589
      %v1591 = vrcp.pop %v1400
      %v1592 = vmul.f32 1.0, %v1591
      %v1593 = vrcp.pop %v1401
      %v1594 = vmul.f32 1.0, %v1593
      %v1595 = vrcp.pop %v1402
      %v1596 = vmul.f32 1.0, %v1595
      %v1597 = vrcp.pop %v1403
      %v1598 = vmul.f32 1.0, %v1597
      %v1599 = vrcp.pop %v1404
      %v1600 = vmul.f32 1.0, %v1599
      %v1601 = vrcp.pop %v1405
      %v1602 = vmul.f32 1.0, %v1601
      %v1603 = vrcp.pop %v1406
      %v1604 = vmul.f32 1.0, %v1603
      %v1605 = vrcp.pop %v1407
      %v1606 = vmul.f32 1.0, %v1605
      %v1607 = vrcp.pop %v1408
      %v1608 = vmul.f32 1.0, %v1607
      %v1609 = vrcp.pop %v1409
      %v1610 = vmul.f32 1.0, %v1609
      %v1611 = vrcp.pop %v1410
      %v1612 = vmul.f32 1.0, %v1611
      %v1613 = vrcp.pop %v1411
      %v1614 = vmul.f32 1.0, %v1613
      %v1615 = vrcp.pop %v1412
      %v1616 = vmul.f32 1.0, %v1615
      %v1617 = vrcp.pop %v1413
      %v1618 = vmul.f32 1.0, %v1617
      %v1619 = vrcp.pop %v1414
      %v1620 = vmul.f32 1.0, %v1619
      %v1621 = vrcp.pop %v1415
      %v1622 = vmul.f32 1.0, %v1621
      %v1623 = vrcp.pop %v1416
      %v1624 = vmul.f32 1.0, %v1623
      %v1625 = vrcp.pop %v1417
      %v1626 = vmul.f32 1.0, %v1625
      %v1627 = vrcp.pop %v1418
      %v1628 = vmul.f32 1.0, %v1627
      %v1629 = vrcp.pop %v1419
      %v1630 = vmul.f32 1.0, %v1629
      %v1631 = vrcp.pop %v1420
      %v1632 = vmul.f32 1.0, %v1631
      %v1633 = vrcp.pop %v1421
      %v1634 = vmul.f32 1.0, %v1633
      %v1635 = vrcp.pop %v1422
      %v1636 = vmul.f32 1.0, %v1635
      %v1637 = vrcp.pop %v1423
      %v1638 = vmul.f32 1.0, %v1637
      %v1639 = vrcp.pop %v1424
      %v1640 = vmul.f32 1.0, %v1639
      %v1641 = vrcp.pop %v1425
      %v1642 = vmul.f32 1.0, %v1641
      %v1643 = vrcp.pop %v1426
      %v1644 = vmul.f32 1.0, %v1643
      %v1645 = vrcp.pop %v1427
      %v1646 = vmul.f32 1.0, %v1645
      %v1647 = vrcp.pop %v1428
      %v1648 = vmul.f32 1.0, %v1647
      %v1649 = vrcp.pop %v1429
      %v1650 = vmul.f32 1.0, %v1649
      %v1651 = vrcp.pop %v1430
      %v1652 = vmul.f32 1.0, %v1651
      %v1653 = vrcp.pop %v1431
      %v1654 = vmul.f32 1.0, %v1653
      %v1655 = vrcp.pop %v1432
      %v1656 = vmul.f32 1.0, %v1655
      %v1657 = vrcp.pop %v1433
      %v1658 = vmul.f32 1.0, %v1657
      %v1659 = vrcp.pop %v1434
      %v1660 = vmul.f32 1.0, %v1659
      %v1661 = vrcp.pop %v1435
      %v1662 = vmul.f32 1.0, %v1661
      %v1663 = vrcp.pop %v1436
      %v1664 = vmul.f32 1.0, %v1663
      %v1665 = vrcp.pop %v1437
      %v1666 = vmul.f32 1.0, %v1665
      %v1667 = vrcp.pop %v1438
      %v1668 = vmul.f32 1.0, %v1667
      %v1669 = vrcp.pop %v1439
      %v1670 = vmul.f32 1.0, %v1669
      %v1671 = vrcp.pop %v1440
      %v1672 = vmul.f32 1.0, %v1671
      %v1673 = vrcp.pop %v1441
      %v1674 = vmul.f32 1.0, %v1673
      %v1675 = vrcp.pop %v1442
      %v1676 = vmul.f32 1.0, %v1675
      %v1677 = vrcp.pop %v1443
      %v1678 = vmul.f32 1.0, %v1677
      %v1679 = vrcp.pop %v1444
      %v1680 = vmul.f32 1.0, %v1679
      %v1681 = vrcp.pop %v1445
      %v1682 = vmul.f32 1.0, %v1681
      %v1683 = vrcp.pop %v1446
      %v1684 = vmul.f32 1.0, %v1683
      %v1685 = vrcp.pop %v1447
      %v1686 = vmul.f32 1.0, %v1685
      %v1687 = vrcp.pop %v1448
      %v1688 = vmul.f32 1.0, %v1687
      %v1689 = vrcp.pop %v1449
      %v1690 = vmul.f32 1.0, %v1689
      %v1691 = vrcp.pop %v1450
      %v1692 = vmul.f32 1.0, %v1691
      %v1693 = vrcp.pop %v1451
      %v1694 = vmul.f32 1.0, %v1693
      %v1695 = vrcp.pop %v1452
      %v1696 = vmul.f32 1.0, %v1695
      %v1697 = vrcp.pop %v1453
      %v1698 = vmul.f32 1.0, %v1697
      %v1699 = vrcp.pop %v1454
      %v1700 = vmul.f32 1.0, %v1699
      %v1701 = vrcp.pop %v1455
      %v1702 = vmul.f32 1.0, %v1701
      %v1703 = vrcp.pop %v1456
      %v1704 = vmul.f32 1.0, %v1703
      %v1705 = vrcp.pop %v1457
      %v1706 = vmul.f32 1.0, %v1705
      %v1707 = vrcp.pop %v1458
      %v1708 = vmul.f32 1.0, %v1707
      %v1709 = vrcp.pop %v1459
      %v1710 = vmul.f32 1.0, %v1709
      %v1711 = vrcp.pop %v1460
      %v1712 = vmul.f32 1.0, %v1711
      %v1713 = vrcp.pop %v1461
      %v1714 = vmul.f32 1.0, %v1713
      %v1715 = vrcp.pop %v1462
      %v1716 = vmul.f32 1.0, %v1715
      %v1717 = vrcp.pop %v1463
      %v1718 = vmul.f32 1.0, %v1717
      %v1719 = vrcp.pop %v1464
      %v1720 = vmul.f32 1.0, %v1719
      %vm1721 = vcmask 7168
      %1722 = vst.msk [vmem:[%s173] sm:$0xff] %vm1721, %v1466
      %1723 = vst.msk [vmem:[%s173 + $0x8] sm:$0xff] %vm1721, %v1468
      %1724 = vst.msk [vmem:[%s173 + $0x10] sm:$0xff] %vm1721, %v1470
      %1725 = vst.msk [vmem:[%s173 + $0x18] sm:$0xff] %vm1721, %v1472
      %1726 = vst.msk [vmem:[%s173 + $0x20] sm:$0xff] %vm1721, %v1474
      %1727 = vst.msk [vmem:[%s173 + $0x28] sm:$0xff] %vm1721, %v1476
      %1728 = vst.msk [vmem:[%s173 + $0x30] sm:$0xff] %vm1721, %v1478
      %1729 = vst.msk [vmem:[%s173 + $0x38] sm:$0xff] %vm1721, %v1480
      %1730 = vst.msk [vmem:[%s173 + $0x40] sm:$0xff] %vm1721, %v1482
      %1731 = vst.msk [vmem:[%s173 + $0x48] sm:$0xff] %vm1721, %v1484
      %1732 = vst.msk [vmem:[%s173 + $0x50] sm:$0xff] %vm1721, %v1486
      %1733 = vst.msk [vmem:[%s173 + $0x58] sm:$0xff] %vm1721, %v1488
      %1734 = vst.msk [vmem:[%s173 + $0x60] sm:$0xff] %vm1721, %v1490
      %1735 = vst.msk [vmem:[%s173 + $0x68] sm:$0xff] %vm1721, %v1492
      %1736 = vst.msk [vmem:[%s173 + $0x70] sm:$0xff] %vm1721, %v1494
      %1737 = vst.msk [vmem:[%s173 + $0x78] sm:$0xff] %vm1721, %v1496
      %1738 = vst.msk [vmem:[%s173 + $0x80] sm:$0xff] %vm1721, %v1498
      %1739 = vst.msk [vmem:[%s173 + $0x88] sm:$0xff] %vm1721, %v1500
      %1740 = vst.msk [vmem:[%s173 + $0x90] sm:$0xff] %vm1721, %v1502
      %1741 = vst.msk [vmem:[%s173 + $0x98] sm:$0xff] %vm1721, %v1504
      %1742 = vst.msk [vmem:[%s173 + $0xa0] sm:$0xff] %vm1721, %v1506
      %1743 = vst.msk [vmem:[%s173 + $0xa8] sm:$0xff] %vm1721, %v1508
      %1744 = vst.msk [vmem:[%s173 + $0xb0] sm:$0xff] %vm1721, %v1510
      %1745 = vst.msk [vmem:[%s173 + $0xb8] sm:$0xff] %vm1721, %v1512
      %1746 = vst.msk [vmem:[%s173 + $0xc0] sm:$0xff] %vm1721, %v1514
      %1747 = vst.msk [vmem:[%s173 + $0xc8] sm:$0xff] %vm1721, %v1516
      %1748 = vst.msk [vmem:[%s173 + $0xd0] sm:$0xff] %vm1721, %v1518
      %1749 = vst.msk [vmem:[%s173 + $0xd8] sm:$0xff] %vm1721, %v1520
      %1750 = vst.msk [vmem:[%s173 + $0xe0] sm:$0xff] %vm1721, %v1522
      %1751 = vst.msk [vmem:[%s173 + $0xe8] sm:$0xff] %vm1721, %v1524
      %1752 = vst.msk [vmem:[%s173 + $0xf0] sm:$0xff] %vm1721, %v1526
      %1753 = vst.msk [vmem:[%s173 + $0xf8] sm:$0xff] %vm1721, %v1528
      %1754 = vst.msk [vmem:[%s173 + $0x100] sm:$0xff] %vm1721, %v1530
      %1755 = vst.msk [vmem:[%s173 + $0x108] sm:$0xff] %vm1721, %v1532
      %1756 = vst.msk [vmem:[%s173 + $0x110] sm:$0xff] %vm1721, %v1534
      %1757 = vst.msk [vmem:[%s173 + $0x118] sm:$0xff] %vm1721, %v1536
      %1758 = vst.msk [vmem:[%s173 + $0x120] sm:$0xff] %vm1721, %v1538
      %1759 = vst.msk [vmem:[%s173 + $0x128] sm:$0xff] %vm1721, %v1540
      %1760 = vst.msk [vmem:[%s173 + $0x130] sm:$0xff] %vm1721, %v1542
      %1761 = vst.msk [vmem:[%s173 + $0x138] sm:$0xff] %vm1721, %v1544
      %1762 = vst.msk [vmem:[%s173 + $0x140] sm:$0xff] %vm1721, %v1546
      %1763 = vst.msk [vmem:[%s173 + $0x148] sm:$0xff] %vm1721, %v1548
      %1764 = vst.msk [vmem:[%s173 + $0x150] sm:$0xff] %vm1721, %v1550
      %1765 = vst.msk [vmem:[%s173 + $0x158] sm:$0xff] %vm1721, %v1552
      %1766 = vst.msk [vmem:[%s173 + $0x160] sm:$0xff] %vm1721, %v1554
      %1767 = vst.msk [vmem:[%s173 + $0x168] sm:$0xff] %vm1721, %v1556
      %1768 = vst.msk [vmem:[%s173 + $0x170] sm:$0xff] %vm1721, %v1558
      %1769 = vst.msk [vmem:[%s173 + $0x178] sm:$0xff] %vm1721, %v1560
      %1770 = vst.msk [vmem:[%s173 + $0x180] sm:$0xff] %vm1721, %v1562
      %1771 = vst.msk [vmem:[%s173 + $0x188] sm:$0xff] %vm1721, %v1564
      %1772 = vst.msk [vmem:[%s173 + $0x190] sm:$0xff] %vm1721, %v1566
      %1773 = vst.msk [vmem:[%s173 + $0x198] sm:$0xff] %vm1721, %v1568
      %1774 = vst.msk [vmem:[%s173 + $0x1a0] sm:$0xff] %vm1721, %v1570
      %1775 = vst.msk [vmem:[%s173 + $0x1a8] sm:$0xff] %vm1721, %v1572
      %1776 = vst.msk [vmem:[%s173 + $0x1b0] sm:$0xff] %vm1721, %v1574
      %1777 = vst.msk [vmem:[%s173 + $0x1b8] sm:$0xff] %vm1721, %v1576
      %1778 = vst.msk [vmem:[%s173 + $0x1c0] sm:$0xff] %vm1721, %v1578
      %1779 = vst.msk [vmem:[%s173 + $0x1c8] sm:$0xff] %vm1721, %v1580
      %1780 = vst.msk [vmem:[%s173 + $0x1d0] sm:$0xff] %vm1721, %v1582
      %1781 = vst.msk [vmem:[%s173 + $0x1d8] sm:$0xff] %vm1721, %v1584
      %1782 = vst.msk [vmem:[%s173 + $0x1e0] sm:$0xff] %vm1721, %v1586
      %1783 = vst.msk [vmem:[%s173 + $0x1e8] sm:$0xff] %vm1721, %v1588
      %1784 = vst.msk [vmem:[%s173 + $0x1f0] sm:$0xff] %vm1721, %v1590
      %1785 = vst.msk [vmem:[%s173 + $0x1f8] sm:$0xff] %vm1721, %v1592
      %1786 = vst.msk [vmem:[%s173 + $0x200] sm:$0xff] %vm1721, %v1594
      %1787 = vst.msk [vmem:[%s173 + $0x208] sm:$0xff] %vm1721, %v1596
      %1788 = vst.msk [vmem:[%s173 + $0x210] sm:$0xff] %vm1721, %v1598
      %1789 = vst.msk [vmem:[%s173 + $0x218] sm:$0xff] %vm1721, %v1600
      %1790 = vst.msk [vmem:[%s173 + $0x220] sm:$0xff] %vm1721, %v1602
      %1791 = vst.msk [vmem:[%s173 + $0x228] sm:$0xff] %vm1721, %v1604
      %1792 = vst.msk [vmem:[%s173 + $0x230] sm:$0xff] %vm1721, %v1606
      %1793 = vst.msk [vmem:[%s173 + $0x238] sm:$0xff] %vm1721, %v1608
      %1794 = vst.msk [vmem:[%s173 + $0x240] sm:$0xff] %vm1721, %v1610
      %1795 = vst.msk [vmem:[%s173 + $0x248] sm:$0xff] %vm1721, %v1612
      %1796 = vst.msk [vmem:[%s173 + $0x250] sm:$0xff] %vm1721, %v1614
      %1797 = vst.msk [vmem:[%s173 + $0x258] sm:$0xff] %vm1721, %v1616
      %1798 = vst.msk [vmem:[%s173 + $0x260] sm:$0xff] %vm1721, %v1618
      %1799 = vst.msk [vmem:[%s173 + $0x268] sm:$0xff] %vm1721, %v1620
      %1800 = vst.msk [vmem:[%s173 + $0x270] sm:$0xff] %vm1721, %v1622
      %1801 = vst.msk [vmem:[%s173 + $0x278] sm:$0xff] %vm1721, %v1624
      %1802 = vst.msk [vmem:[%s173 + $0x280] sm:$0xff] %vm1721, %v1626
      %1803 = vst.msk [vmem:[%s173 + $0x288] sm:$0xff] %vm1721, %v1628
      %1804 = vst.msk [vmem:[%s173 + $0x290] sm:$0xff] %vm1721, %v1630
      %1805 = vst.msk [vmem:[%s173 + $0x298] sm:$0xff] %vm1721, %v1632
      %1806 = vst.msk [vmem:[%s173 + $0x2a0] sm:$0xff] %vm1721, %v1634
      %1807 = vst.msk [vmem:[%s173 + $0x2a8] sm:$0xff] %vm1721, %v1636
      %1808 = vst.msk [vmem:[%s173 + $0x2b0] sm:$0xff] %vm1721, %v1638
      %1809 = vst.msk [vmem:[%s173 + $0x2b8] sm:$0xff] %vm1721, %v1640
      %1810 = vst.msk [vmem:[%s173 + $0x2c0] sm:$0xff] %vm1721, %v1642
      %1811 = vst.msk [vmem:[%s173 + $0x2c8] sm:$0xff] %vm1721, %v1644
      %1812 = vst.msk [vmem:[%s173 + $0x2d0] sm:$0xff] %vm1721, %v1646
      %1813 = vst.msk [vmem:[%s173 + $0x2d8] sm:$0xff] %vm1721, %v1648
      %1814 = vst.msk [vmem:[%s173 + $0x2e0] sm:$0xff] %vm1721, %v1650
      %1815 = vst.msk [vmem:[%s173 + $0x2e8] sm:$0xff] %vm1721, %v1652
      %1816 = vst.msk [vmem:[%s173 + $0x2f0] sm:$0xff] %vm1721, %v1654
      %1817 = vst.msk [vmem:[%s173 + $0x2f8] sm:$0xff] %vm1721, %v1656
      %1818 = vst.msk [vmem:[%s173 + $0x300] sm:$0xff] %vm1721, %v1658
      %1819 = vst.msk [vmem:[%s173 + $0x308] sm:$0xff] %vm1721, %v1660
      %1820 = vst.msk [vmem:[%s173 + $0x310] sm:$0xff] %vm1721, %v1662
      %1821 = vst.msk [vmem:[%s173 + $0x318] sm:$0xff] %vm1721, %v1664
      %1822 = vst.msk [vmem:[%s173 + $0x320] sm:$0xff] %vm1721, %v1666
      %1823 = vst.msk [vmem:[%s173 + $0x328] sm:$0xff] %vm1721, %v1668
      %1824 = vst.msk [vmem:[%s173 + $0x330] sm:$0xff] %vm1721, %v1670
      %1825 = vst.msk [vmem:[%s173 + $0x338] sm:$0xff] %vm1721, %v1672
      %1826 = vst.msk [vmem:[%s173 + $0x340] sm:$0xff] %vm1721, %v1674
      %1827 = vst.msk [vmem:[%s173 + $0x348] sm:$0xff] %vm1721, %v1676
      %1828 = vst.msk [vmem:[%s173 + $0x350] sm:$0xff] %vm1721, %v1678
      %1829 = vst.msk [vmem:[%s173 + $0x358] sm:$0xff] %vm1721, %v1680
      %1830 = vst.msk [vmem:[%s173 + $0x360] sm:$0xff] %vm1721, %v1682
      %1831 = vst.msk [vmem:[%s173 + $0x368] sm:$0xff] %vm1721, %v1684
      %1832 = vst.msk [vmem:[%s173 + $0x370] sm:$0xff] %vm1721, %v1686
      %1833 = vst.msk [vmem:[%s173 + $0x378] sm:$0xff] %vm1721, %v1688
      %1834 = vst.msk [vmem:[%s173 + $0x380] sm:$0xff] %vm1721, %v1690
      %1835 = vst.msk [vmem:[%s173 + $0x388] sm:$0xff] %vm1721, %v1692
      %1836 = vst.msk [vmem:[%s173 + $0x390] sm:$0xff] %vm1721, %v1694
      %1837 = vst.msk [vmem:[%s173 + $0x398] sm:$0xff] %vm1721, %v1696
      %1838 = vst.msk [vmem:[%s173 + $0x3a0] sm:$0xff] %vm1721, %v1698
      %1839 = vst.msk [vmem:[%s173 + $0x3a8] sm:$0xff] %vm1721, %v1700
      %1840 = vst.msk [vmem:[%s173 + $0x3b0] sm:$0xff] %vm1721, %v1702
      %1841 = vst.msk [vmem:[%s173 + $0x3b8] sm:$0xff] %vm1721, %v1704
      %1842 = vst.msk [vmem:[%s173 + $0x3c0] sm:$0xff] %vm1721, %v1706
      %1843 = vst.msk [vmem:[%s173 + $0x3c8] sm:$0xff] %vm1721, %v1708
      %1844 = vst.msk [vmem:[%s173 + $0x3d0] sm:$0xff] %vm1721, %v1710
      %1845 = vst.msk [vmem:[%s173 + $0x3d8] sm:$0xff] %vm1721, %v1712
      %1846 = vst.msk [vmem:[%s173 + $0x3e0] sm:$0xff] %vm1721, %v1714
      %1847 = vst.msk [vmem:[%s173 + $0x3e8] sm:$0xff] %vm1721, %v1716
      %1848 = vst.msk [vmem:[%s173 + $0x3f0] sm:$0xff] %vm1721, %v1718
      %1849 = vst.msk [vmem:[%s173 + $0x3f8] sm:$0xff] %vm1721, %v1720
      %s1850 = smul.u32 128, %s15
      %p1851 = scmp.lt.s32.totalorder %s1850, 255
      %s1852 = scalar_select %p1851, %s1850, 255
      %s1853 = smul.addr %s1852, 8
      %s1854 = scalar_lea.vmem %s3, %s1853
      // Predicated region
      $region33: #{dense_sigmoid.1} parent=31 // pred_check
        %p1855 = pneg %p101
      $region34: #{dense_sigmoid.1} parent=31 // pred_check_branch
        %1857 = sbr.rel (%p1855) target = $region36
      $region35: #{dense_sigmoid.1} parent=31 // pred_region
        %s1858 = smul.u32 128, %s15
      $region36: #{dense_sigmoid.1} parent=31 // pred_fallthru
        _
    $region32: #{dense_sigmoid.1} parent=5 // pred_fallthru
      _
    %p1859 = scmp.le.s32.totalorder 2, %s10
    // Predicated region
    $region37: #{dense_sigmoid.1} parent=5 // pred_check
      %p1860 = pneg %p1859
    $region38: #{dense_sigmoid.1} parent=5 // pred_check_branch
      %1862 = sbr.rel (%p1860) target = $region40
    $region39: #{dense_sigmoid.1} parent=5 // pred_region
      %s1863 = ssub.s32 %s10, 2
      // Predicated region
      $region41: #{dense_sigmoid.1} parent=39 // pred_check
        %p1864 = pneg %p107
      $region42: #{dense_sigmoid.1} parent=39 // pred_check_branch
        %1866 = sbr.rel (%p1864) target = $region44
      $region43: #{dense_sigmoid.1} parent=39 // pred_region
        %s1867 = smul.u32 128, %s16
        %p1868 = scmp.lt.s32.totalorder %s1867, 255
        %s1869 = scalar_select %p1868, %s1867, 255
        %s1870 = smul.addr %s1869, 8
        %s1871 = scalar_lea.vmem %s3, %s1870
      $region44: #{dense_sigmoid.1} parent=39 // pred_fallthru
        _
    $region40: #{dense_sigmoid.1} parent=5 // pred_fallthru
      _
  $region6: #{dense_sigmoid.1} parent=0 // loop_footer
    %s14 = sadd.s32 1, %s10
  $region7: #{dense_sigmoid.1} parent=0 // loop_footer_branch
    %9 = sbr.rel target = $region3
  $region8: #{dense_sigmoid.1} parent=0 // loop_exit
    _

</llo_original>
